<compile_context>
chip_gen: v7x
topology: tpu7x:2x2x1
jax: 0.10.0
libtpu: 0.0.40
codegen_flags: <defaults>
</compile_context>

<pallas_src>
import functools
import math

import jax
import jax.numpy as jnp
from jax.experimental import pallas as pl
from jax.experimental.pallas import tpu as pltpu

# ----------------------------- config ---------------------------------------
IN_FEAT = 16
HIDDEN = 64
DEPTH = 3
NUM_HEADS = 2
HEAD_SIZE = HIDDEN // NUM_HEADS
LN_EPS = 1e-5
OUT_PAD = 128            # lane-dense output width; sliced back to HIDDEN outside
NEG_BIG = -1.0e9         # cross-polyline (off-block-diagonal) attention bias

# row indices of the packed f32 parameter slab
_B0, _G0, _BE0, _B1, _G1, _BE1 = 0, 1, 2, 3, 4, 5
_LNG = 6                  # rows 6 .. 6+DEPTH-1   : per-layer LN gamma
_LNB = 6 + DEPTH          # rows 9 .. 9+DEPTH-1   : per-layer LN beta
VEC_ROWS = 6 + 2 * DEPTH


# ----------------------------- kernel helpers --------------------------------
def _layernorm(h, gamma, beta):
    # two-pass variance E[(x-mu)^2] for parity with torch.nn.LayerNorm
    mu = jnp.mean(h, axis=-1, keepdims=True)
    d = h - mu
    var = jnp.mean(d * d, axis=-1, keepdims=True)
    return d * jax.lax.rsqrt(var + LN_EPS) * gamma + beta


# ----------------------------- kernel ----------------------------------------
def polygraph_kernel(x_ref, mask_ref, bias_ref,
                     w0_ref, w1_ref, wqkv_ref, vec_ref, bqkv_ref,
                     out_ref):
    TB, N, _ = x_ref.shape
    R = TB * N

    b0, g0, be0 = vec_ref[_B0:_B0 + 1, :], vec_ref[_G0:_G0 + 1, :], vec_ref[_BE0:_BE0 + 1, :]
    b1, g1, be1 = vec_ref[_B1:_B1 + 1, :], vec_ref[_G1:_G1 + 1, :], vec_ref[_BE1:_BE1 + 1, :]

    # ---- MLP_0 / MLP_1 on flattened (TB*N, D) rows (one lane-dense matmul each)
    x = x_ref[...].reshape(R, IN_FEAT).astype(jnp.bfloat16)
    h = jnp.dot(x, w0_ref[...], preferred_element_type=jnp.float32) + b0
    h = jnp.maximum(_layernorm(h, g0, be0), 0.0)
    h = jnp.dot(h.astype(jnp.bfloat16), w1_ref[...],
                preferred_element_type=jnp.float32) + b1
    h = jnp.maximum(_layernorm(h, g1, be1), 0.0)

    # ---- combined additive attention bias, computed once per tile:
    #   * bias_ref:  0 on the block diagonal (same polyline), NEG_BIG elsewhere
    #   * (1 - mask) * -10000 == PyTorch extended attention mask on the keys
    #     (mask of all ones == attention_mask=None).
    keym = mask_ref[...].reshape(1, R)                       # (1, R) key validity
    bias = bias_ref[...] + (1.0 - keym) * (-10000.0)         # (R, R) f32

    for i in range(DEPTH):
        # fused QKV projection: one lane-dense H -> 3H matmul per layer; the
        # 1/sqrt(HEAD_SIZE) softmax scale is folded into the Q columns at init.
        qkv = (jnp.dot(h.astype(jnp.bfloat16), wqkv_ref[i],
                       preferred_element_type=jnp.float32)
               + bqkv_ref[i:i + 1, :]).astype(jnp.bfloat16)  # (R, 3H) bf16

        ctx_heads = []
        for hd in range(NUM_HEADS):
            q = qkv[:, hd * HEAD_SIZE:(hd + 1) * HEAD_SIZE]                        # (R, 32)
            k = qkv[:, HIDDEN + hd * HEAD_SIZE:HIDDEN + (hd + 1) * HEAD_SIZE]      # (R, 32)
            v = qkv[:, 2 * HIDDEN + hd * HEAD_SIZE:2 * HIDDEN + (hd + 1) * HEAD_SIZE]

            # block-diagonal attention: one lane-dense (R, R) scores matmul per
            # head instead of TB tiny (N, N) matmuls; cross-polyline entries
            # are killed by the NEG_BIG additive bias before softmax.
            s = jax.lax.dot_general(q, k, (((1,), (1,)), ((), ())),
                                    preferred_element_type=jnp.float32)            # (R, R)
            s = s + bias
            m = jnp.max(s, axis=-1, keepdims=True)
            p = jnp.exp(s - m)
            denom = jnp.sum(p, axis=-1, keepdims=True)
            p = p * pl.reciprocal(denom, approx=True)        # EUP, not VPU div
            ctx_heads.append(jnp.dot(p.astype(jnp.bfloat16), v,
                                     preferred_element_type=jnp.float32))          # (R, 32)

        ctx = jnp.concatenate(ctx_heads, axis=-1)            # (R, H), head0 | head1

        h = jnp.maximum(ctx, 0.0) + h                        # ReLU + residual
        h = _layernorm(h,
                       vec_ref[_LNG + i:_LNG + i + 1, :],
                       vec_ref[_LNB + i:_LNB + i + 1, :])

    # ---- torch.max(h, dim=1)[0]: pooled over all N positions (matches the
    # PyTorch reference).  Lane-pad to 128 so the store is an unmasked vst.
    pooled = jnp.max(h.reshape(TB, N, HIDDEN), axis=1)       # (TB, H)
    out_ref[...] = jnp.concatenate(
        [pooled, jnp.zeros((TB, OUT_PAD - HIDDEN), jnp.float32)], axis=-1)


# ----------------------------- wrapper ----------------------------------------
@functools.partial(jax.jit, static_argnames=("block_rows",))
def polygraph_forward(x, mask, params, block_rows=256):
    """x: (B, N, 16) f32; mask: (B, N) f32 key-validity (1.0 == attend)."""
    B, N, _ = x.shape

    # Tile picker: target ~block_rows flattened rows per grid step (MXU / lane
    # dense for the linears and the block-diagonal attention), then re-balance
    # the tiles so padding is minimal (never degrades to tb=1 for awkward B).
    tb = max(1, min(B, max(1, block_rows // N)))
    grid_n = -(-B // tb)            # ceil-div
    tb = -(-B // grid_n)            # balanced tile -> minimal padding
    bp = grid_n * tb
    if bp != B:                     # pad the batch instead of shrinking tiles
        x = jnp.pad(x, ((0, bp - B), (0, 0), (0, 0)))
        mask = jnp.pad(mask, ((0, bp - B), (0, 0)))
    r = tb * N

    # Block-diagonal additive bias (0 within a polyline, NEG_BIG across),
    # built in plain JAX, resident in VMEM via a constant index_map.
    bid = jnp.repeat(jnp.arange(tb, dtype=jnp.int32), N)            # (r,)
    blockbias = jnp.where(bid[:, None] == bid[None, :],
                          0.0, NEG_BIG).astype(jnp.float32)         # (r, r)

    x_t = x.reshape(grid_n, tb, N, IN_FEAT)
    m_t = mask.reshape(grid_n, tb, N)

    in_specs = (
        [pl.BlockSpec((None, tb, N, IN_FEAT), lambda b: (b, 0, 0, 0)),   # x tile
         pl.BlockSpec((None, tb, N), lambda b: (b, 0, 0)),               # mask tile
         pl.BlockSpec((r, r), lambda b: (0, 0))]                         # block bias
        # weights / packed params: full blocks, constant index_map -> resident
        + [pl.BlockSpec(p.shape, lambda b, nd=p.ndim: (0,) * nd) for p in params]
    )

    out_t = pl.pallas_call(
        polygraph_kernel,
        out_shape=jax.ShapeDtypeStruct((grid_n, tb, OUT_PAD), jnp.float32),
        grid=(grid_n,),
        in_specs=in_specs,
        out_specs=pl.BlockSpec((None, tb, OUT_PAD), lambda b: (b, 0, 0)),
        compiler_params=pltpu.CompilerParams(
            # batch tiles are fully independent -> megacore sharding on
            # multi-TensorCore chips (keep grid_n >= 2 there by lowering
            # block_rows if B is small).  Per-step VMEM footprint at the
            # default block_rows=256 is well under the scoped VMEM limit.
            dimension_semantics=("parallel",)),
    )(x_t, m_t, blockbias, *params)

    return out_t.reshape(bp, OUT_PAD)[:B, :HIDDEN]


# ----------------------------- param init -------------------------------------
def init_params(key):
    ks = jax.random.split(key, 5)

    def w(k, shape, scale=0.02):
        return scale * jax.random.normal(k, shape, jnp.float32)

    # fused QKV weight/bias, columns ordered [Q_h0 Q_h1 | K_h0 K_h1 | V_h0 V_h1]
    # (== PyTorch nn.Linear column order), with 1/sqrt(HEAD_SIZE) folded into
    # the Q columns (equivalent to query_layer / sqrt(dh) before the matmul).
    inv_scale = 1.0 / math.sqrt(HEAD_SIZE)
    wq = w(ks[2], (DEPTH, HIDDEN, HIDDEN)) * inv_scale
    wk = w(ks[3], (DEPTH, HIDDEN, HIDDEN))
    wv = w(ks[4], (DEPTH, HIDDEN, HIDDEN))
    wqkv = jnp.concatenate([wq, wk, wv], axis=-1)            # (DEPTH, H, 3H)
    bqkv = jnp.zeros((DEPTH, 3 * HIDDEN), jnp.float32)       # Q part would be pre-scaled too

    # packed f32 slab: b0,g0,be0,b1,g1,be1, lng[0..D-1], lnb[0..D-1]
    vecs = jnp.zeros((VEC_ROWS, HIDDEN), jnp.float32)
    vecs = vecs.at[_G0].set(1.0).at[_G1].set(1.0)
    vecs = vecs.at[_LNG:_LNG + DEPTH].set(1.0)

    params = [
        # matmul weights stored bf16 (half DMA bytes; f32 accumulation in-kernel)
        w(ks[0], (IN_FEAT, HIDDEN)).astype(jnp.bfloat16),    # w0: MLP_0 Linear
        w(ks[1], (HIDDEN, HIDDEN)).astype(jnp.bfloat16),     # w1: MLP_1 Linear
        wqkv.astype(jnp.bfloat16),                           # fused QKV, stacked over depth
        vecs,                                                # packed biases / LN params
        bqkv,                                                # fused QKV bias
    ]
    return params


# ----------------------------- main --------------------------------------------
if __name__ == "__main__":
    key = jax.random.PRNGKey(0)
    k_x, k_p = jax.random.split(key)

    B, N = 2, 8
    x = jax.random.normal(k_x, (B, N, IN_FEAT), jnp.float32)
    # key-validity mask: 1.0 = attend.  All ones == attention_mask=None in PyTorch.
    mask = jnp.ones((B, N), jnp.float32)

    params = init_params(k_p)

    out = polygraph_forward(x, mask, params)
    out = jax.block_until_ready(out)

    assert out.shape == (B, HIDDEN), out.shape
    assert bool(jnp.all(jnp.isfinite(out)))
    print("KERNEL_OK")
</pallas_src>

<mosaic_0001>
module attributes {stable_mosaic.version = 11 : i64} {
  func.func @polygraph_kernel(%arg0: i32, %arg1: memref<1x2x8x16xf32, #tpu.memory_space<vmem>>, %arg2: memref<1x2x8xf32, #tpu.memory_space<vmem>>, %arg3: memref<16x16xf32, #tpu.memory_space<vmem>>, %arg4: memref<16x64xbf16, #tpu.memory_space<vmem>>, %arg5: memref<64x64xbf16, #tpu.memory_space<vmem>>, %arg6: memref<3x64x192xbf16, #tpu.memory_space<vmem>>, %arg7: memref<12x64xf32, #tpu.memory_space<vmem>>, %arg8: memref<3x192xf32, #tpu.memory_space<vmem>>, %arg9: memref<1x2x128xf32, #tpu.memory_space<vmem>>) attributes {dimension_semantics = [#tpu.dimension_semantics<parallel>], iteration_bounds = array<i64: 1>, scalar_prefetch = 0 : i64, scratch_operands = 0 : i64, tpu.core_type = #tpu.core_type<tc>, window_params = [{transform_indices = @transform_0, window_bounds = array<i64: 1, 2, 8, 16>}, {transform_indices = @transform_1, window_bounds = array<i64: 1, 2, 8>}, {pipeline_mode = #tpu.pipeline_mode<synchronous>, transform_indices = @transform_2, window_bounds = array<i64: 16, 16>}, {pipeline_mode = #tpu.pipeline_mode<synchronous>, transform_indices = @transform_3, window_bounds = array<i64: 16, 64>}, {pipeline_mode = #tpu.pipeline_mode<synchronous>, transform_indices = @transform_4, window_bounds = array<i64: 64, 64>}, {pipeline_mode = #tpu.pipeline_mode<synchronous>, transform_indices = @transform_5, window_bounds = array<i64: 3, 64, 192>}, {pipeline_mode = #tpu.pipeline_mode<synchronous>, transform_indices = @transform_6, window_bounds = array<i64: 12, 64>}, {pipeline_mode = #tpu.pipeline_mode<synchronous>, transform_indices = @transform_7, window_bounds = array<i64: 3, 192>}, {transform_indices = @transform_8, window_bounds = array<i64: 1, 2, 128>}]} {
    %c0 = arith.constant 0 : index
    %c0_0 = arith.constant 0 : index
    %0 = vector.load %arg7[%c0, %c0_0] : memref<12x64xf32, #tpu.memory_space<vmem>>, vector<1x64xf32>
    %c1 = arith.constant 1 : index
    %c0_1 = arith.constant 0 : index
    %1 = vector.load %arg7[%c1, %c0_1] : memref<12x64xf32, #tpu.memory_space<vmem>>, vector<1x64xf32>
    %c2 = arith.constant 2 : index
    %c0_2 = arith.constant 0 : index
    %2 = vector.load %arg7[%c2, %c0_2] : memref<12x64xf32, #tpu.memory_space<vmem>>, vector<1x64xf32>
    %c3 = arith.constant 3 : index
    %c0_3 = arith.constant 0 : index
    %3 = vector.load %arg7[%c3, %c0_3] : memref<12x64xf32, #tpu.memory_space<vmem>>, vector<1x64xf32>
    %c4 = arith.constant 4 : index
    %c0_4 = arith.constant 0 : index
    %4 = vector.load %arg7[%c4, %c0_4] : memref<12x64xf32, #tpu.memory_space<vmem>>, vector<1x64xf32>
    %c5 = arith.constant 5 : index
    %c0_5 = arith.constant 0 : index
    %5 = vector.load %arg7[%c5, %c0_5] : memref<12x64xf32, #tpu.memory_space<vmem>>, vector<1x64xf32>
    %c0_6 = arith.constant 0 : index
    %c0_7 = arith.constant 0 : index
    %c0_8 = arith.constant 0 : index
    %c0_9 = arith.constant 0 : index
    %6 = vector.load %arg1[%c0_6, %c0_7, %c0_8, %c0_9] : memref<1x2x8x16xf32, #tpu.memory_space<vmem>>, vector<1x2x8x16xf32>
    %7 = vector.shape_cast %6 : vector<1x2x8x16xf32> to vector<2x8x16xf32>
    %8 = vector.shape_cast %7 : vector<2x8x16xf32> to vector<16x16xf32>
    %9 = arith.truncf %8 : vector<16x16xf32> to vector<16x16xbf16>
    %c0_10 = arith.constant 0 : index
    %c0_11 = arith.constant 0 : index
    %10 = vector.load %arg4[%c0_10, %c0_11] : memref<16x64xbf16, #tpu.memory_space<vmem>>, vector<16x64xbf16>
    %cst = arith.constant dense<0.000000e+00> : vector<16x64xf32>
    %11 = tpu.matmul %9, %10, %cst {dimension_numbers = #tpu.dot_dimension_numbers<[1], [0], [0], [1], [0, 0, 1, 1], [], []>} : vector<16x16xbf16>, vector<16x64xbf16>, vector<16x64xf32> -> vector<16x64xf32>
    %12 = vector.broadcast %0 : vector<1x64xf32> to vector<16x64xf32>
    %13 = arith.addf %11, %12 : vector<16x64xf32>
    %cst_12 = arith.constant dense<0.000000e+00> : vector<16xf32>
    %14 = vector.multi_reduction <add>, %13, %cst_12 [1] : vector<16x64xf32> to vector<16xf32>
    %15 = vector.shape_cast %14 : vector<16xf32> to vector<16x1xf32>
    %cst_13 = arith.constant 6.400000e+01 : f32
    %16 = vector.broadcast %cst_13 : f32 to vector<16x1xf32>
    %17 = arith.divf %15, %16 : vector<16x1xf32>
    %18 = vector.broadcast %17 : vector<16x1xf32> to vector<16x64xf32>
    %19 = arith.subf %13, %18 : vector<16x64xf32>
    %20 = arith.mulf %19, %19 : vector<16x64xf32>
    %cst_14 = arith.constant dense<0.000000e+00> : vector<16xf32>
    %21 = vector.multi_reduction <add>, %20, %cst_14 [1] : vector<16x64xf32> to vector<16xf32>
    %22 = vector.shape_cast %21 : vector<16xf32> to vector<16x1xf32>
    %cst_15 = arith.constant 6.400000e+01 : f32
    %23 = vector.broadcast %cst_15 : f32 to vector<16x1xf32>
    %24 = arith.divf %22, %23 : vector<16x1xf32>
    %cst_16 = arith.constant 9.99999974E-6 : f32
    %25 = vector.broadcast %cst_16 : f32 to vector<16x1xf32>
    %26 = arith.addf %24, %25 : vector<16x1xf32>
    %27 = math.rsqrt %26 : vector<16x1xf32>
    %28 = vector.broadcast %27 : vector<16x1xf32> to vector<16x64xf32>
    %29 = arith.mulf %19, %28 : vector<16x64xf32>
    %30 = vector.broadcast %1 : vector<1x64xf32> to vector<16x64xf32>
    %31 = arith.mulf %29, %30 : vector<16x64xf32>
    %32 = vector.broadcast %2 : vector<1x64xf32> to vector<16x64xf32>
    %33 = arith.addf %31, %32 : vector<16x64xf32>
    %cst_17 = arith.constant 0.000000e+00 : f32
    %34 = vector.broadcast %cst_17 : f32 to vector<16x64xf32>
    %35 = arith.maximumf %33, %34 : vector<16x64xf32>
    %36 = arith.truncf %35 : vector<16x64xf32> to vector<16x64xbf16>
    %c0_18 = arith.constant 0 : index
    %c0_19 = arith.constant 0 : index
    %37 = vector.load %arg5[%c0_18, %c0_19] : memref<64x64xbf16, #tpu.memory_space<vmem>>, vector<64x64xbf16>
    %cst_20 = arith.constant dense<0.000000e+00> : vector<16x64xf32>
    %38 = tpu.matmul %36, %37, %cst_20 {dimension_numbers = #tpu.dot_dimension_numbers<[1], [0], [0], [1], [0, 0, 1, 1], [], []>} : vector<16x64xbf16>, vector<64x64xbf16>, vector<16x64xf32> -> vector<16x64xf32>
    %39 = vector.broadcast %3 : vector<1x64xf32> to vector<16x64xf32>
    %40 = arith.addf %38, %39 : vector<16x64xf32>
    %cst_21 = arith.constant dense<0.000000e+00> : vector<16xf32>
    %41 = vector.multi_reduction <add>, %40, %cst_21 [1] : vector<16x64xf32> to vector<16xf32>
    %42 = vector.shape_cast %41 : vector<16xf32> to vector<16x1xf32>
    %cst_22 = arith.constant 6.400000e+01 : f32
    %43 = vector.broadcast %cst_22 : f32 to vector<16x1xf32>
    %44 = arith.divf %42, %43 : vector<16x1xf32>
    %45 = vector.broadcast %44 : vector<16x1xf32> to vector<16x64xf32>
    %46 = arith.subf %40, %45 : vector<16x64xf32>
    %47 = arith.mulf %46, %46 : vector<16x64xf32>
    %cst_23 = arith.constant dense<0.000000e+00> : vector<16xf32>
    %48 = vector.multi_reduction <add>, %47, %cst_23 [1] : vector<16x64xf32> to vector<16xf32>
    %49 = vector.shape_cast %48 : vector<16xf32> to vector<16x1xf32>
    %cst_24 = arith.constant 6.400000e+01 : f32
    %50 = vector.broadcast %cst_24 : f32 to vector<16x1xf32>
    %51 = arith.divf %49, %50 : vector<16x1xf32>
    %cst_25 = arith.constant 9.99999974E-6 : f32
    %52 = vector.broadcast %cst_25 : f32 to vector<16x1xf32>
    %53 = arith.addf %51, %52 : vector<16x1xf32>
    %54 = math.rsqrt %53 : vector<16x1xf32>
    %55 = vector.broadcast %54 : vector<16x1xf32> to vector<16x64xf32>
    %56 = arith.mulf %46, %55 : vector<16x64xf32>
    %57 = vector.broadcast %4 : vector<1x64xf32> to vector<16x64xf32>
    %58 = arith.mulf %56, %57 : vector<16x64xf32>
    %59 = vector.broadcast %5 : vector<1x64xf32> to vector<16x64xf32>
    %60 = arith.addf %58, %59 : vector<16x64xf32>
    %cst_26 = arith.constant 0.000000e+00 : f32
    %61 = vector.broadcast %cst_26 : f32 to vector<16x64xf32>
    %62 = arith.maximumf %60, %61 : vector<16x64xf32>
    %c0_27 = arith.constant 0 : index
    %c0_28 = arith.constant 0 : index
    %c0_29 = arith.constant 0 : index
    %63 = vector.load %arg2[%c0_27, %c0_28, %c0_29] : memref<1x2x8xf32, #tpu.memory_space<vmem>>, vector<1x2x8xf32>
    %64 = vector.shape_cast %63 : vector<1x2x8xf32> to vector<2x8xf32>
    %65 = vector.shape_cast %64 : vector<2x8xf32> to vector<1x16xf32>
    %c0_30 = arith.constant 0 : index
    %c0_31 = arith.constant 0 : index
    %66 = vector.load %arg3[%c0_30, %c0_31] : memref<16x16xf32, #tpu.memory_space<vmem>>, vector<16x16xf32>
    %cst_32 = arith.constant 1.000000e+00 : f32
    %67 = vector.broadcast %cst_32 : f32 to vector<1x16xf32>
    %68 = arith.subf %67, %65 : vector<1x16xf32>
    %cst_33 = arith.constant -1.000000e+04 : f32
    %69 = vector.broadcast %cst_33 : f32 to vector<1x16xf32>
    %70 = arith.mulf %68, %69 : vector<1x16xf32>
    %71 = vector.broadcast %70 : vector<1x16xf32> to vector<16x16xf32>
    %72 = arith.addf %66, %71 : vector<16x16xf32>
    %73 = arith.truncf %62 : vector<16x64xf32> to vector<16x64xbf16>
    %c0_34 = arith.constant 0 : index
    %c0_35 = arith.constant 0 : index
    %c0_36 = arith.constant 0 : index
    %74 = vector.load %arg6[%c0_34, %c0_35, %c0_36] : memref<3x64x192xbf16, #tpu.memory_space<vmem>>, vector<1x64x192xbf16>
    %75 = vector.shape_cast %74 : vector<1x64x192xbf16> to vector<64x192xbf16>
    %cst_37 = arith.constant dense<0.000000e+00> : vector<16x192xf32>
    %76 = tpu.matmul %73, %75, %cst_37 {dimension_numbers = #tpu.dot_dimension_numbers<[1], [0], [0], [1], [0, 0, 1, 1], [], []>} : vector<16x64xbf16>, vector<64x192xbf16>, vector<16x192xf32> -> vector<16x192xf32>
    %c0_38 = arith.constant 0 : index
    %c0_39 = arith.constant 0 : index
    %77 = vector.load %arg8[%c0_38, %c0_39] : memref<3x192xf32, #tpu.memory_space<vmem>>, vector<1x192xf32>
    %78 = vector.broadcast %77 : vector<1x192xf32> to vector<16x192xf32>
    %79 = arith.addf %76, %78 : vector<16x192xf32>
    %80 = arith.truncf %79 : vector<16x192xf32> to vector<16x192xbf16>
    %81 = vector.extract_strided_slice %80 {offsets = [0, 0], sizes = [16, 32], strides = [1, 1]} : vector<16x192xbf16> to vector<16x32xbf16>
    %82 = vector.extract_strided_slice %80 {offsets = [0, 64], sizes = [16, 32], strides = [1, 1]} : vector<16x192xbf16> to vector<16x32xbf16>
    %83 = vector.extract_strided_slice %80 {offsets = [0, 128], sizes = [16, 32], strides = [1, 1]} : vector<16x192xbf16> to vector<16x32xbf16>
    %cst_40 = arith.constant dense<0.000000e+00> : vector<16x16xf32>
    %84 = tpu.matmul %81, %82, %cst_40 {dimension_numbers = #tpu.dot_dimension_numbers<[1], [1], [0], [0], [0, 0, 1, 0], [], []>} : vector<16x32xbf16>, vector<16x32xbf16>, vector<16x16xf32> -> vector<16x16xf32>
    %85 = arith.addf %84, %72 : vector<16x16xf32>
    %cst_41 = arith.constant dense<0xFF800000> : vector<16xf32>
    %86 = vector.multi_reduction <maximumf>, %85, %cst_41 [1] : vector<16x16xf32> to vector<16xf32>
    %87 = vector.shape_cast %86 : vector<16xf32> to vector<16x1xf32>
    %88 = vector.broadcast %87 : vector<16x1xf32> to vector<16x16xf32>
    %89 = arith.subf %85, %88 : vector<16x16xf32>
    %90 = math.exp %89 : vector<16x16xf32>
    %cst_42 = arith.constant dense<0.000000e+00> : vector<16xf32>
    %91 = vector.multi_reduction <add>, %90, %cst_42 [1] : vector<16x16xf32> to vector<16xf32>
    %92 = vector.shape_cast %91 : vector<16xf32> to vector<16x1xf32>
    %93 = tpu.reciprocal %92 {approx = true} : vector<16x1xf32> -> vector<16x1xf32>
    %94 = vector.broadcast %93 : vector<16x1xf32> to vector<16x16xf32>
    %95 = arith.mulf %90, %94 : vector<16x16xf32>
    %96 = arith.truncf %95 : vector<16x16xf32> to vector<16x16xbf16>
    %cst_43 = arith.constant dense<0.000000e+00> : vector<16x32xf32>
    %97 = tpu.matmul %96, %83, %cst_43 {dimension_numbers = #tpu.dot_dimension_numbers<[1], [0], [0], [1], [0, 0, 1, 1], [], []>} : vector<16x16xbf16>, vector<16x32xbf16>, vector<16x32xf32> -> vector<16x32xf32>
    %98 = vector.extract_strided_slice %80 {offsets = [0, 32], sizes = [16, 32], strides = [1, 1]} : vector<16x192xbf16> to vector<16x32xbf16>
    %99 = vector.extract_strided_slice %80 {offsets = [0, 96], sizes = [16, 32], strides = [1, 1]} : vector<16x192xbf16> to vector<16x32xbf16>
    %100 = vector.extract_strided_slice %80 {offsets = [0, 160], sizes = [16, 32], strides = [1, 1]} : vector<16x192xbf16> to vector<16x32xbf16>
    %cst_44 = arith.constant dense<0.000000e+00> : vector<16x16xf32>
    %101 = tpu.matmul %98, %99, %cst_44 {dimension_numbers = #tpu.dot_dimension_numbers<[1], [1], [0], [0], [0, 0, 1, 0], [], []>} : vector<16x32xbf16>, vector<16x32xbf16>, vector<16x16xf32> -> vector<16x16xf32>
    %102 = arith.addf %101, %72 : vector<16x16xf32>
    %cst_45 = arith.constant dense<0xFF800000> : vector<16xf32>
    %103 = vector.multi_reduction <maximumf>, %102, %cst_45 [1] : vector<16x16xf32> to vector<16xf32>
    %104 = vector.shape_cast %103 : vector<16xf32> to vector<16x1xf32>
    %105 = vector.broadcast %104 : vector<16x1xf32> to vector<16x16xf32>
    %106 = arith.subf %102, %105 : vector<16x16xf32>
    %107 = math.exp %106 : vector<16x16xf32>
    %cst_46 = arith.constant dense<0.000000e+00> : vector<16xf32>
    %108 = vector.multi_reduction <add>, %107, %cst_46 [1] : vector<16x16xf32> to vector<16xf32>
    %109 = vector.shape_cast %108 : vector<16xf32> to vector<16x1xf32>
    %110 = tpu.reciprocal %109 {approx = true} : vector<16x1xf32> -> vector<16x1xf32>
    %111 = vector.broadcast %110 : vector<16x1xf32> to vector<16x16xf32>
    %112 = arith.mulf %107, %111 : vector<16x16xf32>
    %113 = arith.truncf %112 : vector<16x16xf32> to vector<16x16xbf16>
    %cst_47 = arith.constant dense<0.000000e+00> : vector<16x32xf32>
    %114 = tpu.matmul %113, %100, %cst_47 {dimension_numbers = #tpu.dot_dimension_numbers<[1], [0], [0], [1], [0, 0, 1, 1], [], []>} : vector<16x16xbf16>, vector<16x32xbf16>, vector<16x32xf32> -> vector<16x32xf32>
    %115 = tpu.concatenate %97, %114 in 1 : vector<16x32xf32>, vector<16x32xf32> -> vector<16x64xf32>
    %cst_48 = arith.constant 0.000000e+00 : f32
    %116 = vector.broadcast %cst_48 : f32 to vector<16x64xf32>
    %117 = arith.maximumf %115, %116 : vector<16x64xf32>
    %118 = arith.addf %117, %62 : vector<16x64xf32>
    %c6 = arith.constant 6 : index
    %c0_49 = arith.constant 0 : index
    %119 = vector.load %arg7[%c6, %c0_49] : memref<12x64xf32, #tpu.memory_space<vmem>>, vector<1x64xf32>
    %c9 = arith.constant 9 : index
    %c0_50 = arith.constant 0 : index
    %120 = vector.load %arg7[%c9, %c0_50] : memref<12x64xf32, #tpu.memory_space<vmem>>, vector<1x64xf32>
    %cst_51 = arith.constant dense<0.000000e+00> : vector<16xf32>
    %121 = vector.multi_reduction <add>, %118, %cst_51 [1] : vector<16x64xf32> to vector<16xf32>
    %122 = vector.shape_cast %121 : vector<16xf32> to vector<16x1xf32>
    %cst_52 = arith.constant 6.400000e+01 : f32
    %123 = vector.broadcast %cst_52 : f32 to vector<16x1xf32>
    %124 = arith.divf %122, %123 : vector<16x1xf32>
    %125 = vector.broadcast %124 : vector<16x1xf32> to vector<16x64xf32>
    %126 = arith.subf %118, %125 : vector<16x64xf32>
    %127 = arith.mulf %126, %126 : vector<16x64xf32>
    %cst_53 = arith.constant dense<0.000000e+00> : vector<16xf32>
    %128 = vector.multi_reduction <add>, %127, %cst_53 [1] : vector<16x64xf32> to vector<16xf32>
    %129 = vector.shape_cast %128 : vector<16xf32> to vector<16x1xf32>
    %cst_54 = arith.constant 6.400000e+01 : f32
    %130 = vector.broadcast %cst_54 : f32 to vector<16x1xf32>
    %131 = arith.divf %129, %130 : vector<16x1xf32>
    %cst_55 = arith.constant 9.99999974E-6 : f32
    %132 = vector.broadcast %cst_55 : f32 to vector<16x1xf32>
    %133 = arith.addf %131, %132 : vector<16x1xf32>
    %134 = math.rsqrt %133 : vector<16x1xf32>
    %135 = vector.broadcast %134 : vector<16x1xf32> to vector<16x64xf32>
    %136 = arith.mulf %126, %135 : vector<16x64xf32>
    %137 = vector.broadcast %119 : vector<1x64xf32> to vector<16x64xf32>
    %138 = arith.mulf %136, %137 : vector<16x64xf32>
    %139 = vector.broadcast %120 : vector<1x64xf32> to vector<16x64xf32>
    %140 = arith.addf %138, %139 : vector<16x64xf32>
    %141 = arith.truncf %140 : vector<16x64xf32> to vector<16x64xbf16>
    %c1_56 = arith.constant 1 : index
    %c0_57 = arith.constant 0 : index
    %c0_58 = arith.constant 0 : index
    %142 = vector.load %arg6[%c1_56, %c0_57, %c0_58] : memref<3x64x192xbf16, #tpu.memory_space<vmem>>, vector<1x64x192xbf16>
    %143 = vector.shape_cast %142 : vector<1x64x192xbf16> to vector<64x192xbf16>
    %cst_59 = arith.constant dense<0.000000e+00> : vector<16x192xf32>
    %144 = tpu.matmul %141, %143, %cst_59 {dimension_numbers = #tpu.dot_dimension_numbers<[1], [0], [0], [1], [0, 0, 1, 1], [], []>} : vector<16x64xbf16>, vector<64x192xbf16>, vector<16x192xf32> -> vector<16x192xf32>
    %c1_60 = arith.constant 1 : index
    %c0_61 = arith.constant 0 : index
    %145 = vector.load %arg8[%c1_60, %c0_61] : memref<3x192xf32, #tpu.memory_space<vmem>>, vector<1x192xf32>
    %146 = vector.broadcast %145 : vector<1x192xf32> to vector<16x192xf32>
    %147 = arith.addf %144, %146 : vector<16x192xf32>
    %148 = arith.truncf %147 : vector<16x192xf32> to vector<16x192xbf16>
    %149 = vector.extract_strided_slice %148 {offsets = [0, 0], sizes = [16, 32], strides = [1, 1]} : vector<16x192xbf16> to vector<16x32xbf16>
    %150 = vector.extract_strided_slice %148 {offsets = [0, 64], sizes = [16, 32], strides = [1, 1]} : vector<16x192xbf16> to vector<16x32xbf16>
    %151 = vector.extract_strided_slice %148 {offsets = [0, 128], sizes = [16, 32], strides = [1, 1]} : vector<16x192xbf16> to vector<16x32xbf16>
    %cst_62 = arith.constant dense<0.000000e+00> : vector<16x16xf32>
    %152 = tpu.matmul %149, %150, %cst_62 {dimension_numbers = #tpu.dot_dimension_numbers<[1], [1], [0], [0], [0, 0, 1, 0], [], []>} : vector<16x32xbf16>, vector<16x32xbf16>, vector<16x16xf32> -> vector<16x16xf32>
    %153 = arith.addf %152, %72 : vector<16x16xf32>
    %cst_63 = arith.constant dense<0xFF800000> : vector<16xf32>
    %154 = vector.multi_reduction <maximumf>, %153, %cst_63 [1] : vector<16x16xf32> to vector<16xf32>
    %155 = vector.shape_cast %154 : vector<16xf32> to vector<16x1xf32>
    %156 = vector.broadcast %155 : vector<16x1xf32> to vector<16x16xf32>
    %157 = arith.subf %153, %156 : vector<16x16xf32>
    %158 = math.exp %157 : vector<16x16xf32>
    %cst_64 = arith.constant dense<0.000000e+00> : vector<16xf32>
    %159 = vector.multi_reduction <add>, %158, %cst_64 [1] : vector<16x16xf32> to vector<16xf32>
    %160 = vector.shape_cast %159 : vector<16xf32> to vector<16x1xf32>
    %161 = tpu.reciprocal %160 {approx = true} : vector<16x1xf32> -> vector<16x1xf32>
    %162 = vector.broadcast %161 : vector<16x1xf32> to vector<16x16xf32>
    %163 = arith.mulf %158, %162 : vector<16x16xf32>
    %164 = arith.truncf %163 : vector<16x16xf32> to vector<16x16xbf16>
    %cst_65 = arith.constant dense<0.000000e+00> : vector<16x32xf32>
    %165 = tpu.matmul %164, %151, %cst_65 {dimension_numbers = #tpu.dot_dimension_numbers<[1], [0], [0], [1], [0, 0, 1, 1], [], []>} : vector<16x16xbf16>, vector<16x32xbf16>, vector<16x32xf32> -> vector<16x32xf32>
    %166 = vector.extract_strided_slice %148 {offsets = [0, 32], sizes = [16, 32], strides = [1, 1]} : vector<16x192xbf16> to vector<16x32xbf16>
    %167 = vector.extract_strided_slice %148 {offsets = [0, 96], sizes = [16, 32], strides = [1, 1]} : vector<16x192xbf16> to vector<16x32xbf16>
    %168 = vector.extract_strided_slice %148 {offsets = [0, 160], sizes = [16, 32], strides = [1, 1]} : vector<16x192xbf16> to vector<16x32xbf16>
    %cst_66 = arith.constant dense<0.000000e+00> : vector<16x16xf32>
    %169 = tpu.matmul %166, %167, %cst_66 {dimension_numbers = #tpu.dot_dimension_numbers<[1], [1], [0], [0], [0, 0, 1, 0], [], []>} : vector<16x32xbf16>, vector<16x32xbf16>, vector<16x16xf32> -> vector<16x16xf32>
    %170 = arith.addf %169, %72 : vector<16x16xf32>
    %cst_67 = arith.constant dense<0xFF800000> : vector<16xf32>
    %171 = vector.multi_reduction <maximumf>, %170, %cst_67 [1] : vector<16x16xf32> to vector<16xf32>
    %172 = vector.shape_cast %171 : vector<16xf32> to vector<16x1xf32>
    %173 = vector.broadcast %172 : vector<16x1xf32> to vector<16x16xf32>
    %174 = arith.subf %170, %173 : vector<16x16xf32>
    %175 = math.exp %174 : vector<16x16xf32>
    %cst_68 = arith.constant dense<0.000000e+00> : vector<16xf32>
    %176 = vector.multi_reduction <add>, %175, %cst_68 [1] : vector<16x16xf32> to vector<16xf32>
    %177 = vector.shape_cast %176 : vector<16xf32> to vector<16x1xf32>
    %178 = tpu.reciprocal %177 {approx = true} : vector<16x1xf32> -> vector<16x1xf32>
    %179 = vector.broadcast %178 : vector<16x1xf32> to vector<16x16xf32>
    %180 = arith.mulf %175, %179 : vector<16x16xf32>
    %181 = arith.truncf %180 : vector<16x16xf32> to vector<16x16xbf16>
    %cst_69 = arith.constant dense<0.000000e+00> : vector<16x32xf32>
    %182 = tpu.matmul %181, %168, %cst_69 {dimension_numbers = #tpu.dot_dimension_numbers<[1], [0], [0], [1], [0, 0, 1, 1], [], []>} : vector<16x16xbf16>, vector<16x32xbf16>, vector<16x32xf32> -> vector<16x32xf32>
    %183 = tpu.concatenate %165, %182 in 1 : vector<16x32xf32>, vector<16x32xf32> -> vector<16x64xf32>
    %cst_70 = arith.constant 0.000000e+00 : f32
    %184 = vector.broadcast %cst_70 : f32 to vector<16x64xf32>
    %185 = arith.maximumf %183, %184 : vector<16x64xf32>
    %186 = arith.addf %185, %140 : vector<16x64xf32>
    %c7 = arith.constant 7 : index
    %c0_71 = arith.constant 0 : index
    %187 = vector.load %arg7[%c7, %c0_71] : memref<12x64xf32, #tpu.memory_space<vmem>>, vector<1x64xf32>
    %c10 = arith.constant 10 : index
    %c0_72 = arith.constant 0 : index
    %188 = vector.load %arg7[%c10, %c0_72] : memref<12x64xf32, #tpu.memory_space<vmem>>, vector<1x64xf32>
    %cst_73 = arith.constant dense<0.000000e+00> : vector<16xf32>
    %189 = vector.multi_reduction <add>, %186, %cst_73 [1] : vector<16x64xf32> to vector<16xf32>
    %190 = vector.shape_cast %189 : vector<16xf32> to vector<16x1xf32>
    %cst_74 = arith.constant 6.400000e+01 : f32
    %191 = vector.broadcast %cst_74 : f32 to vector<16x1xf32>
    %192 = arith.divf %190, %191 : vector<16x1xf32>
    %193 = vector.broadcast %192 : vector<16x1xf32> to vector<16x64xf32>
    %194 = arith.subf %186, %193 : vector<16x64xf32>
    %195 = arith.mulf %194, %194 : vector<16x64xf32>
    %cst_75 = arith.constant dense<0.000000e+00> : vector<16xf32>
    %196 = vector.multi_reduction <add>, %195, %cst_75 [1] : vector<16x64xf32> to vector<16xf32>
    %197 = vector.shape_cast %196 : vector<16xf32> to vector<16x1xf32>
    %cst_76 = arith.constant 6.400000e+01 : f32
    %198 = vector.broadcast %cst_76 : f32 to vector<16x1xf32>
    %199 = arith.divf %197, %198 : vector<16x1xf32>
    %cst_77 = arith.constant 9.99999974E-6 : f32
    %200 = vector.broadcast %cst_77 : f32 to vector<16x1xf32>
    %201 = arith.addf %199, %200 : vector<16x1xf32>
    %202 = math.rsqrt %201 : vector<16x1xf32>
    %203 = vector.broadcast %202 : vector<16x1xf32> to vector<16x64xf32>
    %204 = arith.mulf %194, %203 : vector<16x64xf32>
    %205 = vector.broadcast %187 : vector<1x64xf32> to vector<16x64xf32>
    %206 = arith.mulf %204, %205 : vector<16x64xf32>
    %207 = vector.broadcast %188 : vector<1x64xf32> to vector<16x64xf32>
    %208 = arith.addf %206, %207 : vector<16x64xf32>
    %209 = arith.truncf %208 : vector<16x64xf32> to vector<16x64xbf16>
    %c2_78 = arith.constant 2 : index
    %c0_79 = arith.constant 0 : index
    %c0_80 = arith.constant 0 : index
    %210 = vector.load %arg6[%c2_78, %c0_79, %c0_80] : memref<3x64x192xbf16, #tpu.memory_space<vmem>>, vector<1x64x192xbf16>
    %211 = vector.shape_cast %210 : vector<1x64x192xbf16> to vector<64x192xbf16>
    %cst_81 = arith.constant dense<0.000000e+00> : vector<16x192xf32>
    %212 = tpu.matmul %209, %211, %cst_81 {dimension_numbers = #tpu.dot_dimension_numbers<[1], [0], [0], [1], [0, 0, 1, 1], [], []>} : vector<16x64xbf16>, vector<64x192xbf16>, vector<16x192xf32> -> vector<16x192xf32>
    %c2_82 = arith.constant 2 : index
    %c0_83 = arith.constant 0 : index
    %213 = vector.load %arg8[%c2_82, %c0_83] : memref<3x192xf32, #tpu.memory_space<vmem>>, vector<1x192xf32>
    %214 = vector.broadcast %213 : vector<1x192xf32> to vector<16x192xf32>
    %215 = arith.addf %212, %214 : vector<16x192xf32>
    %216 = arith.truncf %215 : vector<16x192xf32> to vector<16x192xbf16>
    %217 = vector.extract_strided_slice %216 {offsets = [0, 0], sizes = [16, 32], strides = [1, 1]} : vector<16x192xbf16> to vector<16x32xbf16>
    %218 = vector.extract_strided_slice %216 {offsets = [0, 64], sizes = [16, 32], strides = [1, 1]} : vector<16x192xbf16> to vector<16x32xbf16>
    %219 = vector.extract_strided_slice %216 {offsets = [0, 128], sizes = [16, 32], strides = [1, 1]} : vector<16x192xbf16> to vector<16x32xbf16>
    %cst_84 = arith.constant dense<0.000000e+00> : vector<16x16xf32>
    %220 = tpu.matmul %217, %218, %cst_84 {dimension_numbers = #tpu.dot_dimension_numbers<[1], [1], [0], [0], [0, 0, 1, 0], [], []>} : vector<16x32xbf16>, vector<16x32xbf16>, vector<16x16xf32> -> vector<16x16xf32>
    %221 = arith.addf %220, %72 : vector<16x16xf32>
    %cst_85 = arith.constant dense<0xFF800000> : vector<16xf32>
    %222 = vector.multi_reduction <maximumf>, %221, %cst_85 [1] : vector<16x16xf32> to vector<16xf32>
    %223 = vector.shape_cast %222 : vector<16xf32> to vector<16x1xf32>
    %224 = vector.broadcast %223 : vector<16x1xf32> to vector<16x16xf32>
    %225 = arith.subf %221, %224 : vector<16x16xf32>
    %226 = math.exp %225 : vector<16x16xf32>
    %cst_86 = arith.constant dense<0.000000e+00> : vector<16xf32>
    %227 = vector.multi_reduction <add>, %226, %cst_86 [1] : vector<16x16xf32> to vector<16xf32>
    %228 = vector.shape_cast %227 : vector<16xf32> to vector<16x1xf32>
    %229 = tpu.reciprocal %228 {approx = true} : vector<16x1xf32> -> vector<16x1xf32>
    %230 = vector.broadcast %229 : vector<16x1xf32> to vector<16x16xf32>
    %231 = arith.mulf %226, %230 : vector<16x16xf32>
    %232 = arith.truncf %231 : vector<16x16xf32> to vector<16x16xbf16>
    %cst_87 = arith.constant dense<0.000000e+00> : vector<16x32xf32>
    %233 = tpu.matmul %232, %219, %cst_87 {dimension_numbers = #tpu.dot_dimension_numbers<[1], [0], [0], [1], [0, 0, 1, 1], [], []>} : vector<16x16xbf16>, vector<16x32xbf16>, vector<16x32xf32> -> vector<16x32xf32>
    %234 = vector.extract_strided_slice %216 {offsets = [0, 32], sizes = [16, 32], strides = [1, 1]} : vector<16x192xbf16> to vector<16x32xbf16>
    %235 = vector.extract_strided_slice %216 {offsets = [0, 96], sizes = [16, 32], strides = [1, 1]} : vector<16x192xbf16> to vector<16x32xbf16>
    %236 = vector.extract_strided_slice %216 {offsets = [0, 160], sizes = [16, 32], strides = [1, 1]} : vector<16x192xbf16> to vector<16x32xbf16>
    %cst_88 = arith.constant dense<0.000000e+00> : vector<16x16xf32>
    %237 = tpu.matmul %234, %235, %cst_88 {dimension_numbers = #tpu.dot_dimension_numbers<[1], [1], [0], [0], [0, 0, 1, 0], [], []>} : vector<16x32xbf16>, vector<16x32xbf16>, vector<16x16xf32> -> vector<16x16xf32>
    %238 = arith.addf %237, %72 : vector<16x16xf32>
    %cst_89 = arith.constant dense<0xFF800000> : vector<16xf32>
    %239 = vector.multi_reduction <maximumf>, %238, %cst_89 [1] : vector<16x16xf32> to vector<16xf32>
    %240 = vector.shape_cast %239 : vector<16xf32> to vector<16x1xf32>
    %241 = vector.broadcast %240 : vector<16x1xf32> to vector<16x16xf32>
    %242 = arith.subf %238, %241 : vector<16x16xf32>
    %243 = math.exp %242 : vector<16x16xf32>
    %cst_90 = arith.constant dense<0.000000e+00> : vector<16xf32>
    %244 = vector.multi_reduction <add>, %243, %cst_90 [1] : vector<16x16xf32> to vector<16xf32>
    %245 = vector.shape_cast %244 : vector<16xf32> to vector<16x1xf32>
    %246 = tpu.reciprocal %245 {approx = true} : vector<16x1xf32> -> vector<16x1xf32>
    %247 = vector.broadcast %246 : vector<16x1xf32> to vector<16x16xf32>
    %248 = arith.mulf %243, %247 : vector<16x16xf32>
    %249 = arith.truncf %248 : vector<16x16xf32> to vector<16x16xbf16>
    %cst_91 = arith.constant dense<0.000000e+00> : vector<16x32xf32>
    %250 = tpu.matmul %249, %236, %cst_91 {dimension_numbers = #tpu.dot_dimension_numbers<[1], [0], [0], [1], [0, 0, 1, 1], [], []>} : vector<16x16xbf16>, vector<16x32xbf16>, vector<16x32xf32> -> vector<16x32xf32>
    %251 = tpu.concatenate %233, %250 in 1 : vector<16x32xf32>, vector<16x32xf32> -> vector<16x64xf32>
    %cst_92 = arith.constant 0.000000e+00 : f32
    %252 = vector.broadcast %cst_92 : f32 to vector<16x64xf32>
    %253 = arith.maximumf %251, %252 : vector<16x64xf32>
    %254 = arith.addf %253, %208 : vector<16x64xf32>
    %c8 = arith.constant 8 : index
    %c0_93 = arith.constant 0 : index
    %255 = vector.load %arg7[%c8, %c0_93] : memref<12x64xf32, #tpu.memory_space<vmem>>, vector<1x64xf32>
    %c11 = arith.constant 11 : index
    %c0_94 = arith.constant 0 : index
    %256 = vector.load %arg7[%c11, %c0_94] : memref<12x64xf32, #tpu.memory_space<vmem>>, vector<1x64xf32>
    %cst_95 = arith.constant dense<0.000000e+00> : vector<16xf32>
    %257 = vector.multi_reduction <add>, %254, %cst_95 [1] : vector<16x64xf32> to vector<16xf32>
    %258 = vector.shape_cast %257 : vector<16xf32> to vector<16x1xf32>
    %cst_96 = arith.constant 6.400000e+01 : f32
    %259 = vector.broadcast %cst_96 : f32 to vector<16x1xf32>
    %260 = arith.divf %258, %259 : vector<16x1xf32>
    %261 = vector.broadcast %260 : vector<16x1xf32> to vector<16x64xf32>
    %262 = arith.subf %254, %261 : vector<16x64xf32>
    %263 = arith.mulf %262, %262 : vector<16x64xf32>
    %cst_97 = arith.constant dense<0.000000e+00> : vector<16xf32>
    %264 = vector.multi_reduction <add>, %263, %cst_97 [1] : vector<16x64xf32> to vector<16xf32>
    %265 = vector.shape_cast %264 : vector<16xf32> to vector<16x1xf32>
    %cst_98 = arith.constant 6.400000e+01 : f32
    %266 = vector.broadcast %cst_98 : f32 to vector<16x1xf32>
    %267 = arith.divf %265, %266 : vector<16x1xf32>
    %cst_99 = arith.constant 9.99999974E-6 : f32
    %268 = vector.broadcast %cst_99 : f32 to vector<16x1xf32>
    %269 = arith.addf %267, %268 : vector<16x1xf32>
    %270 = math.rsqrt %269 : vector<16x1xf32>
    %271 = vector.broadcast %270 : vector<16x1xf32> to vector<16x64xf32>
    %272 = arith.mulf %262, %271 : vector<16x64xf32>
    %273 = vector.broadcast %255 : vector<1x64xf32> to vector<16x64xf32>
    %274 = arith.mulf %272, %273 : vector<16x64xf32>
    %275 = vector.broadcast %256 : vector<1x64xf32> to vector<16x64xf32>
    %276 = arith.addf %274, %275 : vector<16x64xf32>
    %277 = vector.shape_cast %276 : vector<16x64xf32> to vector<2x8x64xf32>
    %cst_100 = arith.constant dense<0xFF800000> : vector<2x64xf32>
    %278 = vector.multi_reduction <maximumf>, %277, %cst_100 [1] : vector<2x8x64xf32> to vector<2x64xf32>
    %cst_101 = arith.constant 0.000000e+00 : f32
    %279 = vector.broadcast %cst_101 : f32 to vector<2x64xf32>
    %280 = tpu.concatenate %278, %279 in 1 : vector<2x64xf32>, vector<2x64xf32> -> vector<2x128xf32>
    %c0_102 = arith.constant 0 : index
    %c0_103 = arith.constant 0 : index
    %c0_104 = arith.constant 0 : index
    %281 = vector.load %arg9[%c0_102, %c0_103, %c0_104] : memref<1x2x128xf32, #tpu.memory_space<vmem>>, vector<1x2x128xf32>
    %282 = vector.shape_cast %281 : vector<1x2x128xf32> to vector<2x128xf32>
    %283 = vector.shape_cast %280 : vector<2x128xf32> to vector<1x2x128xf32>
    tpu.vector_store %arg9[%c0_102, %c0_103, %c0_104], %283 {strides = array<i32>} : memref<1x2x128xf32, #tpu.memory_space<vmem>>, vector<1x2x128xf32>,
    return
  }
  func.func @transform_0(%arg0: i32) -> (i32, i32, i32, i32) {
    %c0_i32 = arith.constant 0 : i32
    %c0_i32_0 = arith.constant 0 : i32
    %c0_i32_1 = arith.constant 0 : i32
    %c0_i32_2 = arith.constant 0 : i32
    return %arg0, %c0_i32, %c0_i32_0, %c0_i32_1 : i32, i32, i32, i32
  }
  func.func @transform_1(%arg0: i32) -> (i32, i32, i32) {
    %c0_i32 = arith.constant 0 : i32
    %c0_i32_0 = arith.constant 0 : i32
    %c0_i32_1 = arith.constant 0 : i32
    return %arg0, %c0_i32, %c0_i32_0 : i32, i32, i32
  }
  func.func @transform_2(%arg0: i32) -> (i32, i32) {
    %c0_i32 = arith.constant 0 : i32
    %c0_i32_0 = arith.constant 0 : i32
    %c0_i32_1 = arith.constant 0 : i32
    return %c0_i32, %c0_i32_0 : i32, i32
  }
  func.func @transform_3(%arg0: i32) -> (i32, i32) {
    %c0_i32 = arith.constant 0 : i32
    %c0_i32_0 = arith.constant 0 : i32
    %c0_i32_1 = arith.constant 0 : i32
    return %c0_i32, %c0_i32_0 : i32, i32
  }
  func.func @transform_4(%arg0: i32) -> (i32, i32) {
    %c0_i32 = arith.constant 0 : i32
    %c0_i32_0 = arith.constant 0 : i32
    %c0_i32_1 = arith.constant 0 : i32
    return %c0_i32, %c0_i32_0 : i32, i32
  }
  func.func @transform_5(%arg0: i32) -> (i32, i32, i32) {
    %c0_i32 = arith.constant 0 : i32
    %c0_i32_0 = arith.constant 0 : i32
    %c0_i32_1 = arith.constant 0 : i32
    %c0_i32_2 = arith.constant 0 : i32
    return %c0_i32, %c0_i32_0, %c0_i32_1 : i32, i32, i32
  }
  func.func @transform_6(%arg0: i32) -> (i32, i32) {
    %c0_i32 = arith.constant 0 : i32
    %c0_i32_0 = arith.constant 0 : i32
    %c0_i32_1 = arith.constant 0 : i32
    return %c0_i32, %c0_i32_0 : i32, i32
  }
  func.func @transform_7(%arg0: i32) -> (i32, i32) {
    %c0_i32 = arith.constant 0 : i32
    %c0_i32_0 = arith.constant 0 : i32
    %c0_i32_1 = arith.constant 0 : i32
    return %c0_i32, %c0_i32_0 : i32, i32
  }
  func.func @transform_8(%arg0: i32) -> (i32, i32, i32) {
    %c0_i32 = arith.constant 0 : i32
    %c0_i32_0 = arith.constant 0 : i32
    %c0_i32_1 = arith.constant 0 : i32
    return %arg0, %c0_i32, %c0_i32_0 : i32, i32, i32
  }
}

</mosaic_0001>

<llo_original>
// kernel: eq.8
$region0: #{eq.8}
  %s0 = inlined_call_operand.vmem [shape: s32[2,8], index: 0, kind: input, shape index: {}]
  %s1 = inlined_call_operand.vmem [shape: s32[16], index: 1, kind: output, shape index: {}]
  $region1: #{eq.8} parent=0
    #allocation0 [shape = 'u8[4096]{0}', space=vmem, size = 0x1000, scoped, tag = 'scoped mem for output reshape']
    #allocation1 [shape = 'u8[4096]{0}', space=vmem, size = 0x1000, scoped, tag = 'scoped mem for input reshape']
    %s3 = sshllo.u32 0, 2
    %v4 = vld [vmem:[%s0] sm:%s3]
    %5 = vst [vmem:[#allocation1] sm:%s3] %v4
    %v6 = vld [vmem:[#allocation1] sm:$0x1]
    %vm7 = vcmask 64512
    %8 = vst.msk [vmem:[#allocation0] sm:$0x1] %vm7, %v6
    %s9 = scalar_lea.vmem [#allocation1], 1
    %v10 = vld [vmem:[%s9] sm:$0x1]
    %11 = vrot.lane.b32.xlu0 %v10, 8
    %v12 = vpop.permute.xlu0 %11
    %vm13 = vcmask 130112
    %14 = vst.msk [vmem:[#allocation0] sm:$0x1] %vm13, %v12
    %s16 = sshllo.u32 0, 1
    %v18 = vld [vmem:[#allocation0] sm:%s16]
    %s19 = sshllo.u32 0, 1
    %20 = vst [vmem:[%s1] sm:%s19] %v18

// kernel: polygraph_forward.1
$region0: #{polygraph_forward.1}
  #allocation0 [shape = 'u32[]', space=smem, size = 0x4, offset = 0x4, fixed_abs, tag = 'smem constant byte address 0x4 - core index']
  #allocation1 [shape = 'u32[144,128]{1,0:T(1,128)}', space=vmem, size = 0x12000, scoped, tag = 'internal scratch']
  %s0 = inlined_call_operand.hbm [shape: f32[1,2,8,16], index: 0, kind: input, shape index: {}]
  %s1 = inlined_call_operand.hbm [shape: f32[1,2,8], index: 1, kind: input, shape index: {}]
  %s2 = inlined_call_operand.vmem [shape: f32[16,16], index: 2, kind: input, shape index: {}]
  %s3 = inlined_call_operand.hbm [shape: bf16[16,64], index: 3, kind: input, shape index: {}]
  %s4 = inlined_call_operand.vmem [shape: bf16[64,64], index: 4, kind: input, shape index: {}]
  %s5 = inlined_call_operand.hbm [shape: bf16[3,64,192], index: 5, kind: input, shape index: {}]
  %s6 = inlined_call_operand.vmem [shape: f32[12,64], index: 6, kind: input, shape index: {}]
  %s7 = inlined_call_operand.hbm [shape: f32[3,192], index: 7, kind: input, shape index: {}]
  %s8 = inlined_call_operand.hbm [shape: f32[1,2,128], index: 8, kind: output, shape index: {}]
  %s9 = sld [smem:[#allocation0]]
  $region62: #{polygraph_forward.1} parent=0
    _
  %s11 = ssub.s32 1, %s9
  %s12 = scalar_select 0, %s11, %s9
  $region1: #{polygraph_forward.1} parent=0
    #allocation2 [shape = 'u8[8192]{0}', space=vmem, size = 0x2000, scoped, tag = 'input window, operand 0, single buffered']
    #allocation3 [shape = 's32[1]{0}', space=sflag, size = 0x4, scoped, tag = 'scoped memory for polygraph_forward.1']
    #allocation4 [shape = 's32[1]{0}', space=sflag, size = 0x4, scoped, tag = 'scoped memory for polygraph_forward.1']
    #allocation5 [shape = 'u8[1024]{0}', space=vmem, size = 0x400, scoped, tag = 'input window, operand 1, single buffered']
    #allocation6 [shape = 's32[1]{0}', space=sflag, size = 0x4, scoped, tag = 'scoped memory for polygraph_forward.1']
    #allocation7 [shape = 'u8[4096]{0}', space=vmem, size = 0x1000, scoped, tag = 'input window, operand 3, single buffered']
    #allocation8 [shape = 'u8[98304]{0}', space=vmem, size = 0x18000, scoped, tag = 'input window, operand 5, single buffered']
    #allocation9 [shape = 's32[1]{0}', space=sflag, size = 0x4, scoped, tag = 'scoped memory for polygraph_forward.1']
    #allocation10 [shape = 'u8[4096]{0}', space=vmem, size = 0x1000, scoped, tag = 'input window, operand 7, single buffered']
    #allocation11 [shape = 'u8[1024]{0}', space=vmem, size = 0x400, scoped, tag = 'output window, operand 0, single buffered']
    %13 = vsyncpa [#allocation3], 0
    %14 = vsyncpa [#allocation6], 0
    %15 = vsyncpa [#allocation9], 0
    %16 = vsyncpa [#allocation4], 0
    // Predicated region
    $region2: #{polygraph_forward.1} parent=1 // pred_check
      _
    $region3: #{polygraph_forward.1} parent=1 // pred_check_branch
      %18 = sbr.rel (0) target = $region5
    $region4: #{polygraph_forward.1} parent=1 // pred_region
      %s20 = ssub.s32 256, 256
      %21 = vsyncadd [#allocation3], %s20
      %s22 = sshll.u32 [#allocation2], 4
      %s23 = int_to_ptr.vmem [resolvable:$true] %s22
      %28 = dma.hbm_to_vmem [thread:$0]  %s0, 256, %s23, [#allocation3], 128, 128, 8
    $region5: #{polygraph_forward.1} parent=1 // pred_fallthru
      _
    // Predicated region
    $region6: #{polygraph_forward.1} parent=1 // pred_check
      _
    $region7: #{polygraph_forward.1} parent=1 // pred_check_branch
      %30 = sbr.rel (0) target = $region9
    $region8: #{polygraph_forward.1} parent=1 // pred_region
      %s32 = ssub.s32 32, 32
      %33 = vsyncadd [#allocation6], %s32
      %s35 = sshll.u32 [#allocation5], 4
      %s36 = int_to_ptr.vmem [resolvable:$true] %s35
      %38 = dma.hbm_to_vmem [thread:$0]  %s1, 32, %s36, [#allocation6]
    $region9: #{polygraph_forward.1} parent=1 // pred_fallthru
      _
    // Predicated region
    $region10: #{polygraph_forward.1} parent=1 // pred_check
      _
    $region11: #{polygraph_forward.1} parent=1 // pred_check_branch
      %40 = sbr.rel (0) target = $region13
    $region12: #{polygraph_forward.1} parent=1 // pred_region
      _
    $region13: #{polygraph_forward.1} parent=1 // pred_fallthru
      _
    // Predicated region
    $region14: #{polygraph_forward.1} parent=1 // pred_check
      _
    $region15: #{polygraph_forward.1} parent=1 // pred_check_branch
      %42 = sbr.rel (0) target = $region17
    $region16: #{polygraph_forward.1} parent=1 // pred_region
      %s44 = ssub.s32 128, 128
      %45 = vsyncadd [#allocation6], %s44
      %s46 = sshll.u32 [#allocation7], 4
      %s47 = int_to_ptr.vmem [resolvable:$true] %s46
      %52 = dma.hbm_to_vmem [thread:$0]  %s3, 128, %s47, [#allocation6], 64, 64, 4
    $region17: #{polygraph_forward.1} parent=1 // pred_fallthru
      _
    // Predicated region
    $region18: #{polygraph_forward.1} parent=1 // pred_check
      _
    $region19: #{polygraph_forward.1} parent=1 // pred_check_branch
      %54 = sbr.rel (0) target = $region21
    $region20: #{polygraph_forward.1} parent=1 // pred_region
      _
    $region21: #{polygraph_forward.1} parent=1 // pred_fallthru
      _
    // Predicated region
    $region22: #{polygraph_forward.1} parent=1 // pred_check
      _
    $region23: #{polygraph_forward.1} parent=1 // pred_check_branch
      %56 = sbr.rel (0) target = $region25
    $region24: #{polygraph_forward.1} parent=1 // pred_region
      %s58 = ssub.s32 3072, 3072
      %59 = vsyncadd [#allocation9], %s58
      %s60 = sshll.u32 [#allocation8], 4
      %s61 = int_to_ptr.vmem [resolvable:$true] %s60
      %66 = dma.hbm_to_vmem [thread:$0]  %s5, 3072, %s61, [#allocation9], 128, 128, 8
    $region25: #{polygraph_forward.1} parent=1 // pred_fallthru
      _
    // Predicated region
    $region26: #{polygraph_forward.1} parent=1 // pred_check
      _
    $region27: #{polygraph_forward.1} parent=1 // pred_check_branch
      %68 = sbr.rel (0) target = $region29
    $region28: #{polygraph_forward.1} parent=1 // pred_region
      _
    $region29: #{polygraph_forward.1} parent=1 // pred_fallthru
      _
    // Predicated region
    $region30: #{polygraph_forward.1} parent=1 // pred_check
      _
    $region31: #{polygraph_forward.1} parent=1 // pred_check_branch
      %70 = sbr.rel (0) target = $region33
    $region32: #{polygraph_forward.1} parent=1 // pred_region
      %s72 = ssub.s32 128, 128
      %73 = vsyncadd [#allocation9], %s72
      %s75 = sshll.u32 [#allocation10], 4
      %s76 = int_to_ptr.vmem [resolvable:$true] %s75
      %78 = dma.hbm_to_vmem [thread:$0]  %s7, 128, %s76, [#allocation9]
    $region33: #{polygraph_forward.1} parent=1 // pred_fallthru
      _
    // Predicated region
    $region34: #{polygraph_forward.1} parent=1 // pred_check
      _
    $region35: #{polygraph_forward.1} parent=1 // pred_check_branch
      %80 = sbr.rel (0) target = $region37
    $region36: #{polygraph_forward.1} parent=1 // pred_region
      %81 = dma.done [#allocation3], 256
    $region37: #{polygraph_forward.1} parent=1 // pred_fallthru
      _
    // Predicated region
    $region38: #{polygraph_forward.1} parent=1 // pred_check
      _
    $region39: #{polygraph_forward.1} parent=1 // pred_check_branch
      %83 = sbr.rel (0) target = $region41
    $region40: #{polygraph_forward.1} parent=1 // pred_region
      %84 = dma.done [#allocation6], 32
    $region41: #{polygraph_forward.1} parent=1 // pred_fallthru
      _
    // Predicated region
    $region42: #{polygraph_forward.1} parent=1 // pred_check
      _
    $region43: #{polygraph_forward.1} parent=1 // pred_check_branch
      %86 = sbr.rel (0) target = $region45
    $region44: #{polygraph_forward.1} parent=1 // pred_region
      %87 = dma.done [#allocation6], 128
    $region45: #{polygraph_forward.1} parent=1 // pred_fallthru
      _
    // Predicated region
    $region46: #{polygraph_forward.1} parent=1 // pred_check
      _
    $region47: #{polygraph_forward.1} parent=1 // pred_check_branch
      %89 = sbr.rel (0) target = $region49
    $region48: #{polygraph_forward.1} parent=1 // pred_region
      %90 = dma.done [#allocation9], 3072
    $region49: #{polygraph_forward.1} parent=1 // pred_fallthru
      _
    // Predicated region
    $region50: #{polygraph_forward.1} parent=1 // pred_check
      _
    $region51: #{polygraph_forward.1} parent=1 // pred_check_branch
      %92 = sbr.rel (0) target = $region53
    $region52: #{polygraph_forward.1} parent=1 // pred_region
      %93 = dma.done [#allocation9], 128
    $region53: #{polygraph_forward.1} parent=1 // pred_fallthru
      _
    %v95 = vld [vmem:[%s6] sm:$0x1]
    %v96 = vld [vmem:[%s6 + $0x1] sm:$0x1]
    %v97 = vld [vmem:[%s6 + $0x2] sm:$0x1]
    %v98 = vld [vmem:[%s6 + $0x3] sm:$0x1]
    %v99 = vld [vmem:[%s6 + $0x4] sm:$0x1]
    %v100 = vld [vmem:[%s6 + $0x5] sm:$0x1]
    %v101 = vld [vmem:[#allocation2] sm:$0xff]
    %v102 = vld [vmem:[#allocation2 + $0x8] sm:$0xff]
    %v103 = vpack.c.bf16 %v102, %v101
    %v104 = vld [vmem:[#allocation7] sm:$0xf]
    %v105 = vld [vmem:[#allocation7 + $0x4] sm:$0xf]
    %v106 = vlaneseq
    %v107 = vshrl.u32 %v106, 7
    %v108 = vsub.s32 0, %v107
    %v109 = vrot.slane %v95, %v108
    %v112 = vunpack.c.l.b16 %v104
    %v113 = vunpack.c.l.b16 %v105
    %v114 = vpack.c.b16 %v113, %v112
    %vm116 = vcmask 130048
    %v118 = vsel %vm116, %v103, 0
    %120 = vmatprep.subr.bf16.mxu0 0
    %121 = vmatpush1.bf16.msra.mxu0 %v114
    %122 = vmatprep.subr.bf16.mxu0 0
    %123 = vmatpush1.bf16.msra.mxu0 0
    %124 = vmatprep.subr.bf16.mxu0 0
    %125 = vmatpush1.bf16.msra.mxu0 0
    %126 = vmatprep.subr.bf16.mxu0 0
    %127 = vmatpush1.bf16.msra.mxu0 0
    %128 = vmatprep.subr.bf16.mxu0 0
    %129 = vmatpush1.bf16.msra.mxu0 0
    %130 = vmatprep.subr.bf16.mxu0 0
    %131 = vmatpush1.bf16.msra.mxu0 0
    %132 = vmatprep.subr.bf16.mxu0 0
    %133 = vmatpush1.bf16.msra.mxu0 0
    %134 = vmatprep.subr.bf16.mxu0 0
    %135 = vmatpush1.bf16.msra.mxu0 0
    %136 = vmatprep.subr.bf16.mxu0 0
    %137 = vmatpush1.bf16.msra.mxu0 0
    %138 = vmatprep.subr.bf16.mxu0 0
    %139 = vmatpush1.bf16.msra.mxu0 0
    %140 = vmatprep.subr.bf16.mxu0 0
    %141 = vmatpush1.bf16.msra.mxu0 0
    %142 = vmatprep.subr.bf16.mxu0 0
    %143 = vmatpush1.bf16.msra.mxu0 0
    %144 = vmatprep.subr.bf16.mxu0 0
    %145 = vmatpush1.bf16.msra.mxu0 0
    %146 = vmatprep.subr.bf16.mxu0 0
    %147 = vmatpush1.bf16.msra.mxu0 0
    %148 = vmatprep.subr.bf16.mxu0 0
    %149 = vmatpush1.bf16.msra.mxu0 0
    %150 = vmatprep.subr.bf16.mxu0 0
    %151 = vmatpush1.bf16.msra.mxu0 0
    %152 = vmatprep.mubr.bf16.mxu0 0
    %153 = vmatmul.mubr.bf16.gmra.mrb[0].mxu0 %v118
    %v154 = vpop.f32.mrb[0].mxu0
    %v155 = vadd.f32 %v109, %v154
    %v156 = vpop.f32.mrb[0].mxu0
    %v157 = vpop.f32.mrb[0].mxu0
    %v158 = vadd.f32 %v109, %v157
    %v159 = vpop.f32.mrb[0].mxu0
    %160 = vdwg.mxu0
    %vm161 = vcmask 523264
    %v162 = vsel %vm161, %v155, 0.0
    %163 = vadd.xlane.f32.xlu0 %v162
    %v164 = vpop.xlane.xlu0 %163
    %v165 = vsel %vm161, %v158, 0.0
    %166 = vadd.xlane.f32.xlu0 %v165
    %v167 = vpop.xlane.xlu0 %166
    %v168 = vrcp.pop 64.0
    %v169 = vmul.f32 %v164, %v168
    %v170 = vmul.f32 %v167, %v168
    %v171 = vsub.f32 %v155, %v169
    %v172 = vsub.f32 %v158, %v170
    %v173 = vmul.f32 %v171, %v171
    %v174 = vmul.f32 %v172, %v172
    %v175 = vsel %vm161, %v173, 0.0
    %176 = vadd.xlane.f32.xlu0 %v175
    %v177 = vpop.xlane.xlu0 %176
    %v178 = vsel %vm161, %v174, 0.0
    %179 = vadd.xlane.f32.xlu0 %v178
    %v180 = vpop.xlane.xlu0 %179
    %v181 = vmul.f32 %v177, %v168
    %v182 = vmul.f32 %v180, %v168
    %v183 = vadd.f32 %v181, 1e-05
    %v184 = vadd.f32 %v182, 1e-05
    %v185 = vrsqrt.pop %v183
    %v186 = vrsqrt.pop %v184
    %v187 = vmul.f32 %v171, %v185
    %v188 = vmul.f32 %v172, %v186
    %v189 = vlaneseq
    %v190 = vshrl.u32 %v189, 7
    %v191 = vsub.s32 0, %v190
    %v192 = vrot.slane %v96, %v191
    %v193 = vmul.f32 %v187, %v192
    %v194 = vmul.f32 %v188, %v192
    %v195 = vlaneseq
    %v196 = vshrl.u32 %v195, 7
    %v197 = vsub.s32 0, %v196
    %v198 = vrot.slane %v97, %v197
    %v199 = vadd.f32 %v193, %v198
    %v200 = vadd.f32 %v194, %v198
    %v201 = vmax.f32 %v199, 0.0
    %v202 = vmax.f32 %v200, 0.0
    %v203 = vpack.c.bf16 %v202, %v201
    %v204 = vld [vmem:[%s4] sm:$0xf]
    %v205 = vld [vmem:[%s4 + $0x4] sm:$0xf]
    %v206 = vld [vmem:[%s4 + $0x8] sm:$0xf]
    %v207 = vld [vmem:[%s4 + $0xc] sm:$0xf]
    %v208 = vld [vmem:[%s4 + $0x10] sm:$0xf]
    %v209 = vld [vmem:[%s4 + $0x14] sm:$0xf]
    %v210 = vld [vmem:[%s4 + $0x18] sm:$0xf]
    %v211 = vld [vmem:[%s4 + $0x1c] sm:$0xf]
    %v212 = vlaneseq
    %v213 = vshrl.u32 %v212, 7
    %v214 = vsub.s32 0, %v213
    %v215 = vrot.slane %v98, %v214
    %v224 = vunpack.c.l.b16 %v204
    %v225 = vunpack.c.l.b16 %v205
    %v226 = vunpack.c.l.b16 %v206
    %v227 = vunpack.c.l.b16 %v207
    %v228 = vunpack.c.l.b16 %v208
    %v229 = vunpack.c.l.b16 %v209
    %v230 = vunpack.c.l.b16 %v210
    %v231 = vunpack.c.l.b16 %v211
    %v232 = vpack.c.b16 %v225, %v224
    %v233 = vpack.c.b16 %v227, %v226
    %v234 = vpack.c.b16 %v229, %v228
    %v235 = vpack.c.b16 %v231, %v230
    %v241 = vsel %vm161, %v203, 0
    %243 = vmatprep.subr.bf16.mxu0 0
    %244 = vmatpush1.bf16.msra.mxu0 %v232
    %245 = vmatprep.subr.bf16.mxu0 0
    %246 = vmatpush1.bf16.msra.mxu0 %v233
    %247 = vmatprep.subr.bf16.mxu0 0
    %248 = vmatpush1.bf16.msra.mxu0 %v234
    %249 = vmatprep.subr.bf16.mxu0 0
    %250 = vmatpush1.bf16.msra.mxu0 %v235
    %251 = vmatprep.subr.bf16.mxu0 0
    %252 = vmatpush1.bf16.msra.mxu0 0
    %253 = vmatprep.subr.bf16.mxu0 0
    %254 = vmatpush1.bf16.msra.mxu0 0
    %255 = vmatprep.subr.bf16.mxu0 0
    %256 = vmatpush1.bf16.msra.mxu0 0
    %257 = vmatprep.subr.bf16.mxu0 0
    %258 = vmatpush1.bf16.msra.mxu0 0
    %259 = vmatprep.subr.bf16.mxu0 0
    %260 = vmatpush1.bf16.msra.mxu0 0
    %261 = vmatprep.subr.bf16.mxu0 0
    %262 = vmatpush1.bf16.msra.mxu0 0
    %263 = vmatprep.subr.bf16.mxu0 0
    %264 = vmatpush1.bf16.msra.mxu0 0
    %265 = vmatprep.subr.bf16.mxu0 0
    %266 = vmatpush1.bf16.msra.mxu0 0
    %267 = vmatprep.subr.bf16.mxu0 0
    %268 = vmatpush1.bf16.msra.mxu0 0
    %269 = vmatprep.subr.bf16.mxu0 0
    %270 = vmatpush1.bf16.msra.mxu0 0
    %271 = vmatprep.subr.bf16.mxu0 0
    %272 = vmatpush1.bf16.msra.mxu0 0
    %273 = vmatprep.subr.bf16.mxu0 0
    %274 = vmatpush1.bf16.msra.mxu0 0
    %275 = vmatprep.mubr.bf16.mxu0 0
    %276 = vmatmul.mubr.bf16.gmra.mrb[0].mxu0 %v241
    %v277 = vpop.f32.mrb[0].mxu0
    %v278 = vadd.f32 %v215, %v277
    %v279 = vpop.f32.mrb[0].mxu0
    %v280 = vpop.f32.mrb[0].mxu0
    %v281 = vadd.f32 %v215, %v280
    %v282 = vpop.f32.mrb[0].mxu0
    %283 = vdwg.mxu0
    %v284 = vsel %vm161, %v278, 0.0
    %285 = vadd.xlane.f32.xlu0 %v284
    %v286 = vpop.xlane.xlu0 %285
    %v287 = vsel %vm161, %v281, 0.0
    %288 = vadd.xlane.f32.xlu0 %v287
    %v289 = vpop.xlane.xlu0 %288
    %v290 = vmul.f32 %v286, %v168
    %v291 = vmul.f32 %v289, %v168
    %v292 = vsub.f32 %v278, %v290
    %v293 = vsub.f32 %v281, %v291
    %v294 = vmul.f32 %v292, %v292
    %v295 = vmul.f32 %v293, %v293
    %v296 = vsel %vm161, %v294, 0.0
    %297 = vadd.xlane.f32.xlu0 %v296
    %v298 = vpop.xlane.xlu0 %297
    %v299 = vsel %vm161, %v295, 0.0
    %300 = vadd.xlane.f32.xlu0 %v299
    %v301 = vpop.xlane.xlu0 %300
    %v302 = vmul.f32 %v298, %v168
    %v303 = vmul.f32 %v301, %v168
    %v304 = vadd.f32 %v302, 1e-05
    %v305 = vadd.f32 %v303, 1e-05
    %v306 = vrsqrt.pop %v304
    %v307 = vrsqrt.pop %v305
    %v308 = vmul.f32 %v292, %v306
    %v309 = vmul.f32 %v293, %v307
    %v310 = vlaneseq
    %v311 = vshrl.u32 %v310, 7
    %v312 = vsub.s32 0, %v311
    %v313 = vrot.slane %v99, %v312
    %v314 = vmul.f32 %v308, %v313
    %v315 = vmul.f32 %v309, %v313
    %v316 = vlaneseq
    %v317 = vshrl.u32 %v316, 7
    %v318 = vsub.s32 0, %v317
    %v319 = vrot.slane %v100, %v318
    %v320 = vadd.f32 %v314, %v319
    %v321 = vadd.f32 %v315, %v319
    %v322 = vmax.f32 %v320, 0.0
    %v323 = vmax.f32 %v321, 0.0
    %v324 = vld [vmem:[#allocation5] sm:$0x3]
    %v326 = vunpack.c.l.s4 1934713408
    %v327 = vunpack.c.0.s8 %v326
    %v328 = vlaneseq
    %v329 = vshrl.u32 %v328, 7
    %v330 = vsub.s32 %v327, %v329
    %v331 = vrot.slane %v324, %v330
    %v332 = vcombine.high %v331, 0.0
    %334 = vrot.lane.b32.xlu0 %v332, 8
    %v335 = vpop.permute.xlu0 %334
    %vm337 = vcmask 64512
    %v338 = vsel %vm337, %v331, %v335
    %v339 = vld [vmem:[%s2] sm:$0xff]
    %v340 = vld [vmem:[%s2 + $0x8] sm:$0xff]
    %v341 = vsub.f32 1.0, %v338
    %v342 = vmul.f32 %v341, -10000.0
    %v343 = vlaneseq
    %v344 = vshrl.u32 %v343, 7
    %v345 = vsub.s32 0, %v344
    %v346 = vrot.slane %v342, %v345
    %v347 = vadd.f32 %v339, %v346
    %v348 = vadd.f32 %v340, %v346
    %v349 = vpack.c.bf16 %v323, %v322
    %v350 = vld [vmem:[#allocation8] sm:$0xff]
    %v351 = vld [vmem:[#allocation8 + $0x8] sm:$0xff]
    %v352 = vld [vmem:[#allocation8 + $0x10] sm:$0xff]
    %v353 = vld [vmem:[#allocation8 + $0x18] sm:$0xff]
    %v354 = vld [vmem:[#allocation8 + $0x20] sm:$0xff]
    %v355 = vld [vmem:[#allocation8 + $0x28] sm:$0xff]
    %v356 = vld [vmem:[#allocation8 + $0x30] sm:$0xff]
    %v357 = vld [vmem:[#allocation8 + $0x38] sm:$0xff]
    %v358 = vld [vmem:[#allocation10] ss:$4 sm:$0x3]
    %v360 = vlaneseq
    %v361 = vshrl.u32 %v360, 7
    %v362 = vsub.s32 0, %v361
    %v363 = vrot.slane %v358, %v362
    %v364 = vlaneseq
    %v365 = vshrl.u32 %v364, 7
    %v366 = vsub.s32 1, %v365
    %v367 = vrot.slane %v358, %v366
    %v378 = vunpack.c.l.b16 %v350
    %v379 = vunpack.c.h.b16 %v350
    %v380 = vunpack.c.l.b16 %v351
    %v381 = vunpack.c.h.b16 %v351
    %v382 = vunpack.c.l.b16 %v352
    %v383 = vunpack.c.h.b16 %v352
    %v384 = vunpack.c.l.b16 %v353
    %v385 = vunpack.c.h.b16 %v353
    %v386 = vunpack.c.l.b16 %v354
    %v387 = vunpack.c.h.b16 %v354
    %v388 = vunpack.c.l.b16 %v355
    %v389 = vunpack.c.h.b16 %v355
    %v390 = vunpack.c.l.b16 %v356
    %v391 = vunpack.c.h.b16 %v356
    %v392 = vunpack.c.l.b16 %v357
    %v393 = vunpack.c.h.b16 %v357
    %v394 = vpack.c.b16 %v380, %v378
    %v395 = vpack.c.b16 %v381, %v379
    %v396 = vpack.c.b16 %v384, %v382
    %v397 = vpack.c.b16 %v385, %v383
    %v398 = vpack.c.b16 %v388, %v386
    %v399 = vpack.c.b16 %v389, %v387
    %v400 = vpack.c.b16 %v392, %v390
    %v401 = vpack.c.b16 %v393, %v391
    %v411 = vsel %vm161, %v349, 0
    %413 = vmatprep.subr.bf16.mxu0 %v395
    %414 = vmatpush1.bf16.msra.mxu0 %v394
    %415 = vmatprep.subr.bf16.mxu0 %v397
    %416 = vmatpush1.bf16.msra.mxu0 %v396
    %417 = vmatprep.subr.bf16.mxu0 %v399
    %418 = vmatpush1.bf16.msra.mxu0 %v398
    %419 = vmatprep.subr.bf16.mxu0 %v401
    %420 = vmatpush1.bf16.msra.mxu0 %v400
    %421 = vmatprep.subr.bf16.mxu0 0
    %422 = vmatpush1.bf16.msra.mxu0 0
    %423 = vmatprep.subr.bf16.mxu0 0
    %424 = vmatpush1.bf16.msra.mxu0 0
    %425 = vmatprep.subr.bf16.mxu0 0
    %426 = vmatpush1.bf16.msra.mxu0 0
    %427 = vmatprep.subr.bf16.mxu0 0
    %428 = vmatpush1.bf16.msra.mxu0 0
    %429 = vmatprep.subr.bf16.mxu0 0
    %430 = vmatpush1.bf16.msra.mxu0 0
    %431 = vmatprep.subr.bf16.mxu0 0
    %432 = vmatpush1.bf16.msra.mxu0 0
    %433 = vmatprep.subr.bf16.mxu0 0
    %434 = vmatpush1.bf16.msra.mxu0 0
    %435 = vmatprep.subr.bf16.mxu0 0
    %436 = vmatpush1.bf16.msra.mxu0 0
    %437 = vmatprep.subr.bf16.mxu0 0
    %438 = vmatpush1.bf16.msra.mxu0 0
    %439 = vmatprep.subr.bf16.mxu0 0
    %440 = vmatpush1.bf16.msra.mxu0 0
    %441 = vmatprep.subr.bf16.mxu0 0
    %442 = vmatpush1.bf16.msra.mxu0 0
    %443 = vmatprep.subr.bf16.mxu0 0
    %444 = vmatpush1.bf16.msra.mxu0 0
    %445 = vmatprep.mubr.bf16.mxu0 0
    %446 = vmatmul.mubr.bf16.gmra.mrb[0].mxu0 %v411
    %v447 = vpop.f32.mrb[0].mxu0
    %v448 = vadd.f32 %v363, %v447
    %v449 = vpop.f32.mrb[0].mxu0
    %v450 = vadd.f32 %v367, %v449
    %v451 = vpop.f32.mrb[0].mxu0
    %v452 = vadd.f32 %v363, %v451
    %v453 = vpop.f32.mrb[0].mxu0
    %v454 = vadd.f32 %v367, %v453
    %455 = vdwg.mxu0
    %v456 = vpack.c.bf16 %v452, %v448
    %v457 = vpack.c.bf16 %v454, %v450
    %459 = vrot.lane.b32.xlu0 %v456, 64
    %v460 = vpop.permute.xlu0 %459
    %vm461 = vcmask 261120
    %v463 = vsel %vm461, %v456, 0
    %v466 = vsel %vm461, %v460, 0
    %468 = vmatprep.subr.bf16.mxu0 0
    %469 = vmatpush1.bf16.xpose.msra.mxu0 %v466
    %470 = vmatprep.subr.bf16.mxu0 0
    %471 = vmatpush1.bf16.xpose.msra.mxu0 0
    %472 = vmatprep.subr.bf16.mxu0 0
    %473 = vmatpush1.bf16.xpose.msra.mxu0 0
    %474 = vmatprep.subr.bf16.mxu0 0
    %475 = vmatpush1.bf16.xpose.msra.mxu0 0
    %476 = vmatprep.subr.bf16.mxu0 0
    %477 = vmatpush1.bf16.xpose.msra.mxu0 0
    %478 = vmatprep.subr.bf16.mxu0 0
    %479 = vmatpush1.bf16.xpose.msra.mxu0 0
    %480 = vmatprep.subr.bf16.mxu0 0
    %481 = vmatpush1.bf16.xpose.msra.mxu0 0
    %482 = vmatprep.subr.bf16.mxu0 0
    %483 = vmatpush1.bf16.xpose.msra.mxu0 0
    %484 = vmatprep.subr.bf16.mxu0 0
    %485 = vmatpush1.bf16.xpose.msra.mxu0 0
    %486 = vmatprep.subr.bf16.mxu0 0
    %487 = vmatpush1.bf16.xpose.msra.mxu0 0
    %488 = vmatprep.subr.bf16.mxu0 0
    %489 = vmatpush1.bf16.xpose.msra.mxu0 0
    %490 = vmatprep.subr.bf16.mxu0 0
    %491 = vmatpush1.bf16.xpose.msra.mxu0 0
    %492 = vmatprep.subr.bf16.mxu0 0
    %493 = vmatpush1.bf16.xpose.msra.mxu0 0
    %494 = vmatprep.subr.bf16.mxu0 0
    %495 = vmatpush1.bf16.xpose.msra.mxu0 0
    %496 = vmatprep.subr.bf16.mxu0 0
    %497 = vmatpush1.bf16.xpose.msra.mxu0 0
    %498 = vmatprep.subr.bf16.mxu0 0
    %499 = vmatpush1.bf16.xpose.msra.mxu0 0
    %500 = vmatprep.mubr.bf16.mxu0 0
    %501 = vmatmul.mubr.bf16.gmra.mrb[0].mxu0 %v463
    %v502 = vpop.f32.mrb[0].mxu0
    %v503 = vadd.f32 %v347, %v502
    %v504 = vpop.f32.mrb[0].mxu0
    %v505 = vpop.f32.mrb[0].mxu0
    %v506 = vadd.f32 %v348, %v505
    %v507 = vpop.f32.mrb[0].mxu0
    %508 = vdwg.mxu0
    %v509 = vsel %vm116, %v503, -inf
    %510 = vmax.xlane.f32.xlu0 %v509
    %v511 = vpop.xlane.xlu0 %510
    %v512 = vsel %vm116, %v506, -inf
    %513 = vmax.xlane.f32.xlu0 %v512
    %v514 = vpop.xlane.xlu0 %513
    %v515 = vsub.f32 %v503, %v511
    %v516 = vsub.f32 %v506, %v514
    %v517 = vmul.f32 %v515, 1.442695
    %v518 = vpow.pop %v517
    %v519 = vmul.f32 %v516, 1.442695
    %v520 = vpow.pop %v519
    %v521 = vsel %vm116, %v518, 0.0
    %522 = vadd.xlane.f32.xlu0 %v521
    %v523 = vpop.xlane.xlu0 %522
    %v524 = vsel %vm116, %v520, 0.0
    %525 = vadd.xlane.f32.xlu0 %v524
    %v526 = vpop.xlane.xlu0 %525
    %v527 = vrcp.pop %v523
    %v528 = vrcp.pop %v526
    %v529 = vmul.f32 %v518, %v527
    %v530 = vmul.f32 %v520, %v528
    %v531 = vpack.c.bf16 %v530, %v529
    %v533 = vsel %vm116, %v531, 0
    %535 = vmatprep.subr.bf16.mxu0 0
    %536 = vmatpush1.bf16.msra.mxu0 %v457
    %537 = vmatprep.subr.bf16.mxu0 0
    %538 = vmatpush1.bf16.msra.mxu0 0
    %539 = vmatprep.subr.bf16.mxu0 0
    %540 = vmatpush1.bf16.msra.mxu0 0
    %541 = vmatprep.subr.bf16.mxu0 0
    %542 = vmatpush1.bf16.msra.mxu0 0
    %543 = vmatprep.subr.bf16.mxu0 0
    %544 = vmatpush1.bf16.msra.mxu0 0
    %545 = vmatprep.subr.bf16.mxu0 0
    %546 = vmatpush1.bf16.msra.mxu0 0
    %547 = vmatprep.subr.bf16.mxu0 0
    %548 = vmatpush1.bf16.msra.mxu0 0
    %549 = vmatprep.subr.bf16.mxu0 0
    %550 = vmatpush1.bf16.msra.mxu0 0
    %551 = vmatprep.subr.bf16.mxu0 0
    %552 = vmatpush1.bf16.msra.mxu0 0
    %553 = vmatprep.subr.bf16.mxu0 0
    %554 = vmatpush1.bf16.msra.mxu0 0
    %555 = vmatprep.subr.bf16.mxu0 0
    %556 = vmatpush1.bf16.msra.mxu0 0
    %557 = vmatprep.subr.bf16.mxu0 0
    %558 = vmatpush1.bf16.msra.mxu0 0
    %559 = vmatprep.subr.bf16.mxu0 0
    %560 = vmatpush1.bf16.msra.mxu0 0
    %561 = vmatprep.subr.bf16.mxu0 0
    %562 = vmatpush1.bf16.msra.mxu0 0
    %563 = vmatprep.subr.bf16.mxu0 0
    %564 = vmatpush1.bf16.msra.mxu0 0
    %565 = vmatprep.subr.bf16.mxu0 0
    %566 = vmatpush1.bf16.msra.mxu0 0
    %567 = vmatprep.mubr.bf16.mxu0 0
    %568 = vmatmul.mubr.bf16.gmra.mrb[0].mxu0 %v533
    %v569 = vpop.f32.mrb[0].mxu0
    %v570 = vadd.f32 0.0, %v569
    %v571 = vpop.f32.mrb[0].mxu0
    %v572 = vpop.f32.mrb[0].mxu0
    %v573 = vadd.f32 0.0, %v572
    %v574 = vpop.f32.mrb[0].mxu0
    %575 = vdwg.mxu0
    %576 = vrot.lane.b32.xlu0 %v456, 96
    %v577 = vpop.permute.xlu0 %576
    %578 = vrot.lane.b32.xlu0 %v456, 32
    %v579 = vpop.permute.xlu0 %578
    %v581 = vsel %vm461, %v577, 0
    %v584 = vsel %vm461, %v579, 0
    %586 = vmatprep.subr.bf16.mxu0 0
    %587 = vmatpush1.bf16.xpose.msra.mxu0 %v584
    %588 = vmatprep.subr.bf16.mxu0 0
    %589 = vmatpush1.bf16.xpose.msra.mxu0 0
    %590 = vmatprep.subr.bf16.mxu0 0
    %591 = vmatpush1.bf16.xpose.msra.mxu0 0
    %592 = vmatprep.subr.bf16.mxu0 0
    %593 = vmatpush1.bf16.xpose.msra.mxu0 0
    %594 = vmatprep.subr.bf16.mxu0 0
    %595 = vmatpush1.bf16.xpose.msra.mxu0 0
    %596 = vmatprep.subr.bf16.mxu0 0
    %597 = vmatpush1.bf16.xpose.msra.mxu0 0
    %598 = vmatprep.subr.bf16.mxu0 0
    %599 = vmatpush1.bf16.xpose.msra.mxu0 0
    %600 = vmatprep.subr.bf16.mxu0 0
    %601 = vmatpush1.bf16.xpose.msra.mxu0 0
    %602 = vmatprep.subr.bf16.mxu0 0
    %603 = vmatpush1.bf16.xpose.msra.mxu0 0
    %604 = vmatprep.subr.bf16.mxu0 0
    %605 = vmatpush1.bf16.xpose.msra.mxu0 0
    %606 = vmatprep.subr.bf16.mxu0 0
    %607 = vmatpush1.bf16.xpose.msra.mxu0 0
    %608 = vmatprep.subr.bf16.mxu0 0
    %609 = vmatpush1.bf16.xpose.msra.mxu0 0
    %610 = vmatprep.subr.bf16.mxu0 0
    %611 = vmatpush1.bf16.xpose.msra.mxu0 0
    %612 = vmatprep.subr.bf16.mxu0 0
    %613 = vmatpush1.bf16.xpose.msra.mxu0 0
    %614 = vmatprep.subr.bf16.mxu0 0
    %615 = vmatpush1.bf16.xpose.msra.mxu0 0
    %616 = vmatprep.subr.bf16.mxu0 0
    %617 = vmatpush1.bf16.xpose.msra.mxu0 0
    %618 = vmatprep.mubr.bf16.mxu0 0
    %619 = vmatmul.mubr.bf16.gmra.mrb[0].mxu0 %v581
    %v620 = vpop.f32.mrb[0].mxu0
    %v621 = vadd.f32 %v347, %v620
    %v622 = vpop.f32.mrb[0].mxu0
    %v623 = vpop.f32.mrb[0].mxu0
    %v624 = vadd.f32 %v348, %v623
    %v625 = vpop.f32.mrb[0].mxu0
    %626 = vdwg.mxu0
    %v627 = vsel %vm116, %v621, -inf
    %628 = vmax.xlane.f32.xlu0 %v627
    %v629 = vpop.xlane.xlu0 %628
    %v630 = vsel %vm116, %v624, -inf
    %631 = vmax.xlane.f32.xlu0 %v630
    %v632 = vpop.xlane.xlu0 %631
    %v633 = vsub.f32 %v621, %v629
    %v634 = vsub.f32 %v624, %v632
    %v635 = vmul.f32 %v633, 1.442695
    %v636 = vpow.pop %v635
    %v637 = vmul.f32 %v634, 1.442695
    %v638 = vpow.pop %v637
    %v639 = vsel %vm116, %v636, 0.0
    %640 = vadd.xlane.f32.xlu0 %v639
    %v641 = vpop.xlane.xlu0 %640
    %v642 = vsel %vm116, %v638, 0.0
    %643 = vadd.xlane.f32.xlu0 %v642
    %v644 = vpop.xlane.xlu0 %643
    %v645 = vrcp.pop %v641
    %v646 = vrcp.pop %v644
    %v647 = vmul.f32 %v636, %v645
    %v648 = vmul.f32 %v638, %v646
    %v649 = vpack.c.bf16 %v648, %v647
    %651 = vrot.lane.b32.xlu0 %v457, 96
    %v652 = vpop.permute.xlu0 %651
    %v655 = vsel %vm116, %v649, 0
    %657 = vmatprep.subr.bf16.mxu0 0
    %658 = vmatpush1.bf16.msra.mxu0 %v652
    %659 = vmatprep.subr.bf16.mxu0 0
    %660 = vmatpush1.bf16.msra.mxu0 0
    %661 = vmatprep.subr.bf16.mxu0 0
    %662 = vmatpush1.bf16.msra.mxu0 0
    %663 = vmatprep.subr.bf16.mxu0 0
    %664 = vmatpush1.bf16.msra.mxu0 0
    %665 = vmatprep.subr.bf16.mxu0 0
    %666 = vmatpush1.bf16.msra.mxu0 0
    %667 = vmatprep.subr.bf16.mxu0 0
    %668 = vmatpush1.bf16.msra.mxu0 0
    %669 = vmatprep.subr.bf16.mxu0 0
    %670 = vmatpush1.bf16.msra.mxu0 0
    %671 = vmatprep.subr.bf16.mxu0 0
    %672 = vmatpush1.bf16.msra.mxu0 0
    %673 = vmatprep.subr.bf16.mxu0 0
    %674 = vmatpush1.bf16.msra.mxu0 0
    %675 = vmatprep.subr.bf16.mxu0 0
    %676 = vmatpush1.bf16.msra.mxu0 0
    %677 = vmatprep.subr.bf16.mxu0 0
    %678 = vmatpush1.bf16.msra.mxu0 0
    %679 = vmatprep.subr.bf16.mxu0 0
    %680 = vmatpush1.bf16.msra.mxu0 0
    %681 = vmatprep.subr.bf16.mxu0 0
    %682 = vmatpush1.bf16.msra.mxu0 0
    %683 = vmatprep.subr.bf16.mxu0 0
    %684 = vmatpush1.bf16.msra.mxu0 0
    %685 = vmatprep.subr.bf16.mxu0 0
    %686 = vmatpush1.bf16.msra.mxu0 0
    %687 = vmatprep.subr.bf16.mxu0 0
    %688 = vmatpush1.bf16.msra.mxu0 0
    %689 = vmatprep.mubr.bf16.mxu0 0
    %690 = vmatmul.mubr.bf16.gmra.mrb[0].mxu0 %v655
    %v691 = vpop.f32.mrb[0].mxu0
    %v692 = vadd.f32 0.0, %v691
    %v693 = vpop.f32.mrb[0].mxu0
    %v694 = vpop.f32.mrb[0].mxu0
    %v695 = vadd.f32 0.0, %v694
    %v696 = vpop.f32.mrb[0].mxu0
    %697 = vdwg.mxu0
    %700 = vrot.lane.b32.xlu0 %v692, 32
    %v701 = vpop.permute.xlu0 %700
    %702 = vrot.lane.b32.xlu0 %v695, 32
    %v703 = vpop.permute.xlu0 %702
    %v706 = vsel %vm461, %v570, %v701
    %v707 = vsel %vm461, %v573, %v703
    %v708 = vmax.f32 %v706, 0.0
    %v709 = vmax.f32 %v707, 0.0
    %v710 = vadd.f32 %v708, %v322
    %v711 = vadd.f32 %v709, %v323
    %v712 = vld [vmem:[%s6 + $0x6] sm:$0x1]
    %v713 = vld [vmem:[%s6 + $0x9] sm:$0x1]
    %v714 = vsel %vm161, %v710, 0.0
    %715 = vadd.xlane.f32.xlu0 %v714
    %v716 = vpop.xlane.xlu0 %715
    %v717 = vsel %vm161, %v711, 0.0
    %718 = vadd.xlane.f32.xlu0 %v717
    %v719 = vpop.xlane.xlu0 %718
    %v720 = vmul.f32 %v716, %v168
    %v721 = vmul.f32 %v719, %v168
    %v722 = vsub.f32 %v710, %v720
    %v723 = vsub.f32 %v711, %v721
    %v724 = vmul.f32 %v722, %v722
    %v725 = vmul.f32 %v723, %v723
    %v726 = vsel %vm161, %v724, 0.0
    %727 = vadd.xlane.f32.xlu0 %v726
    %v728 = vpop.xlane.xlu0 %727
    %v729 = vsel %vm161, %v725, 0.0
    %730 = vadd.xlane.f32.xlu0 %v729
    %v731 = vpop.xlane.xlu0 %730
    %v732 = vmul.f32 %v728, %v168
    %v733 = vmul.f32 %v731, %v168
    %v734 = vadd.f32 %v732, 1e-05
    %v735 = vadd.f32 %v733, 1e-05
    %v736 = vrsqrt.pop %v734
    %v737 = vrsqrt.pop %v735
    %v738 = vmul.f32 %v722, %v736
    %v739 = vmul.f32 %v723, %v737
    %v740 = vlaneseq
    %v741 = vshrl.u32 %v740, 7
    %v742 = vsub.s32 0, %v741
    %v743 = vrot.slane %v712, %v742
    %v744 = vmul.f32 %v738, %v743
    %v745 = vmul.f32 %v739, %v743
    %v746 = vlaneseq
    %v747 = vshrl.u32 %v746, 7
    %v748 = vsub.s32 0, %v747
    %v749 = vrot.slane %v713, %v748
    %v750 = vadd.f32 %v744, %v749
    %v751 = vadd.f32 %v745, %v749
    %v752 = vpack.c.bf16 %v751, %v750
    %s753 = scalar_lea.vmem [#allocation8], 64
    %v754 = vld [vmem:[%s753] sm:$0xff]
    %v755 = vld [vmem:[%s753 + $0x8] sm:$0xff]
    %v756 = vld [vmem:[%s753 + $0x10] sm:$0xff]
    %v757 = vld [vmem:[%s753 + $0x18] sm:$0xff]
    %v758 = vld [vmem:[%s753 + $0x20] sm:$0xff]
    %v759 = vld [vmem:[%s753 + $0x28] sm:$0xff]
    %v760 = vld [vmem:[%s753 + $0x30] sm:$0xff]
    %v761 = vld [vmem:[%s753 + $0x38] sm:$0xff]
    %s762 = scalar_lea.vmem [#allocation10], 1
    %v763 = vld [vmem:[%s762] ss:$4 sm:$0x3]
    %v765 = vlaneseq
    %v766 = vshrl.u32 %v765, 7
    %v767 = vsub.s32 0, %v766
    %v768 = vrot.slane %v763, %v767
    %v769 = vlaneseq
    %v770 = vshrl.u32 %v769, 7
    %v771 = vsub.s32 1, %v770
    %v772 = vrot.slane %v763, %v771
    %v783 = vunpack.c.l.b16 %v754
    %v784 = vunpack.c.h.b16 %v754
    %v785 = vunpack.c.l.b16 %v755
    %v786 = vunpack.c.h.b16 %v755
    %v787 = vunpack.c.l.b16 %v756
    %v788 = vunpack.c.h.b16 %v756
    %v789 = vunpack.c.l.b16 %v757
    %v790 = vunpack.c.h.b16 %v757
    %v791 = vunpack.c.l.b16 %v758
    %v792 = vunpack.c.h.b16 %v758
    %v793 = vunpack.c.l.b16 %v759
    %v794 = vunpack.c.h.b16 %v759
    %v795 = vunpack.c.l.b16 %v760
    %v796 = vunpack.c.h.b16 %v760
    %v797 = vunpack.c.l.b16 %v761
    %v798 = vunpack.c.h.b16 %v761
    %v799 = vpack.c.b16 %v785, %v783
    %v800 = vpack.c.b16 %v786, %v784
    %v801 = vpack.c.b16 %v789, %v787
    %v802 = vpack.c.b16 %v790, %v788
    %v803 = vpack.c.b16 %v793, %v791
    %v804 = vpack.c.b16 %v794, %v792
    %v805 = vpack.c.b16 %v797, %v795
    %v806 = vpack.c.b16 %v798, %v796
    %v816 = vsel %vm161, %v752, 0
    %818 = vmatprep.subr.bf16.mxu0 %v800
    %819 = vmatpush1.bf16.msra.mxu0 %v799
    %820 = vmatprep.subr.bf16.mxu0 %v802
    %821 = vmatpush1.bf16.msra.mxu0 %v801
    %822 = vmatprep.subr.bf16.mxu0 %v804
    %823 = vmatpush1.bf16.msra.mxu0 %v803
    %824 = vmatprep.subr.bf16.mxu0 %v806
    %825 = vmatpush1.bf16.msra.mxu0 %v805
    %826 = vmatprep.subr.bf16.mxu0 0
    %827 = vmatpush1.bf16.msra.mxu0 0
    %828 = vmatprep.subr.bf16.mxu0 0
    %829 = vmatpush1.bf16.msra.mxu0 0
    %830 = vmatprep.subr.bf16.mxu0 0
    %831 = vmatpush1.bf16.msra.mxu0 0
    %832 = vmatprep.subr.bf16.mxu0 0
    %833 = vmatpush1.bf16.msra.mxu0 0
    %834 = vmatprep.subr.bf16.mxu0 0
    %835 = vmatpush1.bf16.msra.mxu0 0
    %836 = vmatprep.subr.bf16.mxu0 0
    %837 = vmatpush1.bf16.msra.mxu0 0
    %838 = vmatprep.subr.bf16.mxu0 0
    %839 = vmatpush1.bf16.msra.mxu0 0
    %840 = vmatprep.subr.bf16.mxu0 0
    %841 = vmatpush1.bf16.msra.mxu0 0
    %842 = vmatprep.subr.bf16.mxu0 0
    %843 = vmatpush1.bf16.msra.mxu0 0
    %844 = vmatprep.subr.bf16.mxu0 0
    %845 = vmatpush1.bf16.msra.mxu0 0
    %846 = vmatprep.subr.bf16.mxu0 0
    %847 = vmatpush1.bf16.msra.mxu0 0
    %848 = vmatprep.subr.bf16.mxu0 0
    %849 = vmatpush1.bf16.msra.mxu0 0
    %850 = vmatprep.mubr.bf16.mxu0 0
    %851 = vmatmul.mubr.bf16.gmra.mrb[0].mxu0 %v816
    %v852 = vpop.f32.mrb[0].mxu0
    %v853 = vadd.f32 %v768, %v852
    %v854 = vpop.f32.mrb[0].mxu0
    %v855 = vadd.f32 %v772, %v854
    %v856 = vpop.f32.mrb[0].mxu0
    %v857 = vadd.f32 %v768, %v856
    %v858 = vpop.f32.mrb[0].mxu0
    %v859 = vadd.f32 %v772, %v858
    %860 = vdwg.mxu0
    %v861 = vpack.c.bf16 %v857, %v853
    %v862 = vpack.c.bf16 %v859, %v855
    %864 = vrot.lane.b32.xlu0 %v861, 64
    %v865 = vpop.permute.xlu0 %864
    %v867 = vsel %vm461, %v861, 0
    %v870 = vsel %vm461, %v865, 0
    %872 = vmatprep.subr.bf16.mxu0 0
    %873 = vmatpush1.bf16.xpose.msra.mxu0 %v870
    %874 = vmatprep.subr.bf16.mxu0 0
    %875 = vmatpush1.bf16.xpose.msra.mxu0 0
    %876 = vmatprep.subr.bf16.mxu0 0
    %877 = vmatpush1.bf16.xpose.msra.mxu0 0
    %878 = vmatprep.subr.bf16.mxu0 0
    %879 = vmatpush1.bf16.xpose.msra.mxu0 0
    %880 = vmatprep.subr.bf16.mxu0 0
    %881 = vmatpush1.bf16.xpose.msra.mxu0 0
    %882 = vmatprep.subr.bf16.mxu0 0
    %883 = vmatpush1.bf16.xpose.msra.mxu0 0
    %884 = vmatprep.subr.bf16.mxu0 0
    %885 = vmatpush1.bf16.xpose.msra.mxu0 0
    %886 = vmatprep.subr.bf16.mxu0 0
    %887 = vmatpush1.bf16.xpose.msra.mxu0 0
    %888 = vmatprep.subr.bf16.mxu0 0
    %889 = vmatpush1.bf16.xpose.msra.mxu0 0
    %890 = vmatprep.subr.bf16.mxu0 0
    %891 = vmatpush1.bf16.xpose.msra.mxu0 0
    %892 = vmatprep.subr.bf16.mxu0 0
    %893 = vmatpush1.bf16.xpose.msra.mxu0 0
    %894 = vmatprep.subr.bf16.mxu0 0
    %895 = vmatpush1.bf16.xpose.msra.mxu0 0
    %896 = vmatprep.subr.bf16.mxu0 0
    %897 = vmatpush1.bf16.xpose.msra.mxu0 0
    %898 = vmatprep.subr.bf16.mxu0 0
    %899 = vmatpush1.bf16.xpose.msra.mxu0 0
    %900 = vmatprep.subr.bf16.mxu0 0
    %901 = vmatpush1.bf16.xpose.msra.mxu0 0
    %902 = vmatprep.subr.bf16.mxu0 0
    %903 = vmatpush1.bf16.xpose.msra.mxu0 0
    %904 = vmatprep.mubr.bf16.mxu0 0
    %905 = vmatmul.mubr.bf16.gmra.mrb[0].mxu0 %v867
    %v906 = vpop.f32.mrb[0].mxu0
    %v907 = vadd.f32 %v347, %v906
    %v908 = vpop.f32.mrb[0].mxu0
    %v909 = vpop.f32.mrb[0].mxu0
    %v910 = vadd.f32 %v348, %v909
    %v911 = vpop.f32.mrb[0].mxu0
    %912 = vdwg.mxu0
    %v913 = vsel %vm116, %v907, -inf
    %914 = vmax.xlane.f32.xlu0 %v913
    %v915 = vpop.xlane.xlu0 %914
    %v916 = vsel %vm116, %v910, -inf
    %917 = vmax.xlane.f32.xlu0 %v916
    %v918 = vpop.xlane.xlu0 %917
    %v919 = vsub.f32 %v907, %v915
    %v920 = vsub.f32 %v910, %v918
    %v921 = vmul.f32 %v919, 1.442695
    %v922 = vpow.pop %v921
    %v923 = vmul.f32 %v920, 1.442695
    %v924 = vpow.pop %v923
    %v925 = vsel %vm116, %v922, 0.0
    %926 = vadd.xlane.f32.xlu0 %v925
    %v927 = vpop.xlane.xlu0 %926
    %v928 = vsel %vm116, %v924, 0.0
    %929 = vadd.xlane.f32.xlu0 %v928
    %v930 = vpop.xlane.xlu0 %929
    %v931 = vrcp.pop %v927
    %v932 = vrcp.pop %v930
    %v933 = vmul.f32 %v922, %v931
    %v934 = vmul.f32 %v924, %v932
    %v935 = vpack.c.bf16 %v934, %v933
    %v937 = vsel %vm116, %v935, 0
    %939 = vmatprep.subr.bf16.mxu0 0
    %940 = vmatpush1.bf16.msra.mxu0 %v862
    %941 = vmatprep.subr.bf16.mxu0 0
    %942 = vmatpush1.bf16.msra.mxu0 0
    %943 = vmatprep.subr.bf16.mxu0 0
    %944 = vmatpush1.bf16.msra.mxu0 0
    %945 = vmatprep.subr.bf16.mxu0 0
    %946 = vmatpush1.bf16.msra.mxu0 0
    %947 = vmatprep.subr.bf16.mxu0 0
    %948 = vmatpush1.bf16.msra.mxu0 0
    %949 = vmatprep.subr.bf16.mxu0 0
    %950 = vmatpush1.bf16.msra.mxu0 0
    %951 = vmatprep.subr.bf16.mxu0 0
    %952 = vmatpush1.bf16.msra.mxu0 0
    %953 = vmatprep.subr.bf16.mxu0 0
    %954 = vmatpush1.bf16.msra.mxu0 0
    %955 = vmatprep.subr.bf16.mxu0 0
    %956 = vmatpush1.bf16.msra.mxu0 0
    %957 = vmatprep.subr.bf16.mxu0 0
    %958 = vmatpush1.bf16.msra.mxu0 0
    %959 = vmatprep.subr.bf16.mxu0 0
    %960 = vmatpush1.bf16.msra.mxu0 0
    %961 = vmatprep.subr.bf16.mxu0 0
    %962 = vmatpush1.bf16.msra.mxu0 0
    %963 = vmatprep.subr.bf16.mxu0 0
    %964 = vmatpush1.bf16.msra.mxu0 0
    %965 = vmatprep.subr.bf16.mxu0 0
    %966 = vmatpush1.bf16.msra.mxu0 0
    %967 = vmatprep.subr.bf16.mxu0 0
    %968 = vmatpush1.bf16.msra.mxu0 0
    %969 = vmatprep.subr.bf16.mxu0 0
    %970 = vmatpush1.bf16.msra.mxu0 0
    %971 = vmatprep.mubr.bf16.mxu0 0
    %972 = vmatmul.mubr.bf16.gmra.mrb[0].mxu0 %v937
    %v973 = vpop.f32.mrb[0].mxu0
    %v974 = vadd.f32 0.0, %v973
    %v975 = vpop.f32.mrb[0].mxu0
    %v976 = vpop.f32.mrb[0].mxu0
    %v977 = vadd.f32 0.0, %v976
    %v978 = vpop.f32.mrb[0].mxu0
    %979 = vdwg.mxu0
    %980 = vrot.lane.b32.xlu0 %v861, 96
    %v981 = vpop.permute.xlu0 %980
    %982 = vrot.lane.b32.xlu0 %v861, 32
    %v983 = vpop.permute.xlu0 %982
    %v985 = vsel %vm461, %v981, 0
    %v988 = vsel %vm461, %v983, 0
    %990 = vmatprep.subr.bf16.mxu0 0
    %991 = vmatpush1.bf16.xpose.msra.mxu0 %v988
    %992 = vmatprep.subr.bf16.mxu0 0
    %993 = vmatpush1.bf16.xpose.msra.mxu0 0
    %994 = vmatprep.subr.bf16.mxu0 0
    %995 = vmatpush1.bf16.xpose.msra.mxu0 0
    %996 = vmatprep.subr.bf16.mxu0 0
    %997 = vmatpush1.bf16.xpose.msra.mxu0 0
    %998 = vmatprep.subr.bf16.mxu0 0
    %999 = vmatpush1.bf16.xpose.msra.mxu0 0
    %1000 = vmatprep.subr.bf16.mxu0 0
    %1001 = vmatpush1.bf16.xpose.msra.mxu0 0
    %1002 = vmatprep.subr.bf16.mxu0 0
    %1003 = vmatpush1.bf16.xpose.msra.mxu0 0
    %1004 = vmatprep.subr.bf16.mxu0 0
    %1005 = vmatpush1.bf16.xpose.msra.mxu0 0
    %1006 = vmatprep.subr.bf16.mxu0 0
    %1007 = vmatpush1.bf16.xpose.msra.mxu0 0
    %1008 = vmatprep.subr.bf16.mxu0 0
    %1009 = vmatpush1.bf16.xpose.msra.mxu0 0
    %1010 = vmatprep.subr.bf16.mxu0 0
    %1011 = vmatpush1.bf16.xpose.msra.mxu0 0
    %1012 = vmatprep.subr.bf16.mxu0 0
    %1013 = vmatpush1.bf16.xpose.msra.mxu0 0
    %1014 = vmatprep.subr.bf16.mxu0 0
    %1015 = vmatpush1.bf16.xpose.msra.mxu0 0
    %1016 = vmatprep.subr.bf16.mxu0 0
    %1017 = vmatpush1.bf16.xpose.msra.mxu0 0
    %1018 = vmatprep.subr.bf16.mxu0 0
    %1019 = vmatpush1.bf16.xpose.msra.mxu0 0
    %1020 = vmatprep.subr.bf16.mxu0 0
    %1021 = vmatpush1.bf16.xpose.msra.mxu0 0
    %1022 = vmatprep.mubr.bf16.mxu0 0
    %1023 = vmatmul.mubr.bf16.gmra.mrb[0].mxu0 %v985
    %v1024 = vpop.f32.mrb[0].mxu0
    %v1025 = vadd.f32 %v347, %v1024
    %v1026 = vpop.f32.mrb[0].mxu0
    %v1027 = vpop.f32.mrb[0].mxu0
    %v1028 = vadd.f32 %v348, %v1027
    %v1029 = vpop.f32.mrb[0].mxu0
    %1030 = vdwg.mxu0
    %v1031 = vsel %vm116, %v1025, -inf
    %1032 = vmax.xlane.f32.xlu0 %v1031
    %v1033 = vpop.xlane.xlu0 %1032
    %v1034 = vsel %vm116, %v1028, -inf
    %1035 = vmax.xlane.f32.xlu0 %v1034
    %v1036 = vpop.xlane.xlu0 %1035
    %v1037 = vsub.f32 %v1025, %v1033
    %v1038 = vsub.f32 %v1028, %v1036
    %v1039 = vmul.f32 %v1037, 1.442695
    %v1040 = vpow.pop %v1039
    %v1041 = vmul.f32 %v1038, 1.442695
    %v1042 = vpow.pop %v1041
    %v1043 = vsel %vm116, %v1040, 0.0
    %1044 = vadd.xlane.f32.xlu0 %v1043
    %v1045 = vpop.xlane.xlu0 %1044
    %v1046 = vsel %vm116, %v1042, 0.0
    %1047 = vadd.xlane.f32.xlu0 %v1046
    %v1048 = vpop.xlane.xlu0 %1047
    %v1049 = vrcp.pop %v1045
    %v1050 = vrcp.pop %v1048
    %v1051 = vmul.f32 %v1040, %v1049
    %v1052 = vmul.f32 %v1042, %v1050
    %v1053 = vpack.c.bf16 %v1052, %v1051
    %1055 = vrot.lane.b32.xlu0 %v862, 96
    %v1056 = vpop.permute.xlu0 %1055
    %v1059 = vsel %vm116, %v1053, 0
    %1061 = vmatprep.subr.bf16.mxu0 0
    %1062 = vmatpush1.bf16.msra.mxu0 %v1056
    %1063 = vmatprep.subr.bf16.mxu0 0
    %1064 = vmatpush1.bf16.msra.mxu0 0
    %1065 = vmatprep.subr.bf16.mxu0 0
    %1066 = vmatpush1.bf16.msra.mxu0 0
    %1067 = vmatprep.subr.bf16.mxu0 0
    %1068 = vmatpush1.bf16.msra.mxu0 0
    %1069 = vmatprep.subr.bf16.mxu0 0
    %1070 = vmatpush1.bf16.msra.mxu0 0
    %1071 = vmatprep.subr.bf16.mxu0 0
    %1072 = vmatpush1.bf16.msra.mxu0 0
    %1073 = vmatprep.subr.bf16.mxu0 0
    %1074 = vmatpush1.bf16.msra.mxu0 0
    %1075 = vmatprep.subr.bf16.mxu0 0
    %1076 = vmatpush1.bf16.msra.mxu0 0
    %1077 = vmatprep.subr.bf16.mxu0 0
    %1078 = vmatpush1.bf16.msra.mxu0 0
    %1079 = vmatprep.subr.bf16.mxu0 0
    %1080 = vmatpush1.bf16.msra.mxu0 0
    %1081 = vmatprep.subr.bf16.mxu0 0
    %1082 = vmatpush1.bf16.msra.mxu0 0
    %1083 = vmatprep.subr.bf16.mxu0 0
    %1084 = vmatpush1.bf16.msra.mxu0 0
    %1085 = vmatprep.subr.bf16.mxu0 0
    %1086 = vmatpush1.bf16.msra.mxu0 0
    %1087 = vmatprep.subr.bf16.mxu0 0
    %1088 = vmatpush1.bf16.msra.mxu0 0
    %1089 = vmatprep.subr.bf16.mxu0 0
    %1090 = vmatpush1.bf16.msra.mxu0 0
    %1091 = vmatprep.subr.bf16.mxu0 0
    %1092 = vmatpush1.bf16.msra.mxu0 0
    %1093 = vmatprep.mubr.bf16.mxu0 0
    %1094 = vmatmul.mubr.bf16.gmra.mrb[0].mxu0 %v1059
    %v1095 = vpop.f32.mrb[0].mxu0
    %v1096 = vadd.f32 0.0, %v1095
    %v1097 = vpop.f32.mrb[0].mxu0
    %v1098 = vpop.f32.mrb[0].mxu0
    %v1099 = vadd.f32 0.0, %v1098
    %v1100 = vpop.f32.mrb[0].mxu0
    %1101 = vdwg.mxu0
    %1104 = vrot.lane.b32.xlu0 %v1096, 32
    %v1105 = vpop.permute.xlu0 %1104
    %1106 = vrot.lane.b32.xlu0 %v1099, 32
    %v1107 = vpop.permute.xlu0 %1106
    %v1110 = vsel %vm461, %v974, %v1105
    %v1111 = vsel %vm461, %v977, %v1107
    %v1112 = vmax.f32 %v1110, 0.0
    %v1113 = vmax.f32 %v1111, 0.0
    %v1114 = vadd.f32 %v1112, %v750
    %v1115 = vadd.f32 %v1113, %v751
    %v1116 = vld [vmem:[%s6 + $0x7] sm:$0x1]
    %v1117 = vld [vmem:[%s6 + $0xa] sm:$0x1]
    %v1118 = vsel %vm161, %v1114, 0.0
    %1119 = vadd.xlane.f32.xlu0 %v1118
    %v1120 = vpop.xlane.xlu0 %1119
    %v1121 = vsel %vm161, %v1115, 0.0
    %1122 = vadd.xlane.f32.xlu0 %v1121
    %v1123 = vpop.xlane.xlu0 %1122
    %v1124 = vmul.f32 %v1120, %v168
    %v1125 = vmul.f32 %v1123, %v168
    %v1126 = vsub.f32 %v1114, %v1124
    %v1127 = vsub.f32 %v1115, %v1125
    %v1128 = vmul.f32 %v1126, %v1126
    %v1129 = vmul.f32 %v1127, %v1127
    %v1130 = vsel %vm161, %v1128, 0.0
    %1131 = vadd.xlane.f32.xlu0 %v1130
    %v1132 = vpop.xlane.xlu0 %1131
    %v1133 = vsel %vm161, %v1129, 0.0
    %1134 = vadd.xlane.f32.xlu0 %v1133
    %v1135 = vpop.xlane.xlu0 %1134
    %v1136 = vmul.f32 %v1132, %v168
    %v1137 = vmul.f32 %v1135, %v168
    %v1138 = vadd.f32 %v1136, 1e-05
    %v1139 = vadd.f32 %v1137, 1e-05
    %v1140 = vrsqrt.pop %v1138
    %v1141 = vrsqrt.pop %v1139
    %v1142 = vmul.f32 %v1126, %v1140
    %v1143 = vmul.f32 %v1127, %v1141
    %v1144 = vlaneseq
    %v1145 = vshrl.u32 %v1144, 7
    %v1146 = vsub.s32 0, %v1145
    %v1147 = vrot.slane %v1116, %v1146
    %v1148 = vmul.f32 %v1142, %v1147
    %v1149 = vmul.f32 %v1143, %v1147
    %v1150 = vlaneseq
    %v1151 = vshrl.u32 %v1150, 7
    %v1152 = vsub.s32 0, %v1151
    %v1153 = vrot.slane %v1117, %v1152
    %v1154 = vadd.f32 %v1148, %v1153
    %v1155 = vadd.f32 %v1149, %v1153
    %v1156 = vpack.c.bf16 %v1155, %v1154
    %s1157 = scalar_lea.vmem [#allocation8], 128
    %v1158 = vld [vmem:[%s1157] sm:$0xff]
    %v1159 = vld [vmem:[%s1157 + $0x8] sm:$0xff]
    %v1160 = vld [vmem:[%s1157 + $0x10] sm:$0xff]
    %v1161 = vld [vmem:[%s1157 + $0x18] sm:$0xff]
    %v1162 = vld [vmem:[%s1157 + $0x20] sm:$0xff]
    %v1163 = vld [vmem:[%s1157 + $0x28] sm:$0xff]
    %v1164 = vld [vmem:[%s1157 + $0x30] sm:$0xff]
    %v1165 = vld [vmem:[%s1157 + $0x38] sm:$0xff]
    %s1166 = scalar_lea.vmem [#allocation10], 2
    %v1167 = vld [vmem:[%s1166] ss:$4 sm:$0x3]
    %v1169 = vlaneseq
    %v1170 = vshrl.u32 %v1169, 7
    %v1171 = vsub.s32 0, %v1170
    %v1172 = vrot.slane %v1167, %v1171
    %v1173 = vlaneseq
    %v1174 = vshrl.u32 %v1173, 7
    %v1175 = vsub.s32 1, %v1174
    %v1176 = vrot.slane %v1167, %v1175
    %v1187 = vunpack.c.l.b16 %v1158
    %v1188 = vunpack.c.h.b16 %v1158
    %v1189 = vunpack.c.l.b16 %v1159
    %v1190 = vunpack.c.h.b16 %v1159
    %v1191 = vunpack.c.l.b16 %v1160
    %v1192 = vunpack.c.h.b16 %v1160
    %v1193 = vunpack.c.l.b16 %v1161
    %v1194 = vunpack.c.h.b16 %v1161
    %v1195 = vunpack.c.l.b16 %v1162
    %v1196 = vunpack.c.h.b16 %v1162
    %v1197 = vunpack.c.l.b16 %v1163
    %v1198 = vunpack.c.h.b16 %v1163
    %v1199 = vunpack.c.l.b16 %v1164
    %v1200 = vunpack.c.h.b16 %v1164
    %v1201 = vunpack.c.l.b16 %v1165
    %v1202 = vunpack.c.h.b16 %v1165
    %v1203 = vpack.c.b16 %v1189, %v1187
    %v1204 = vpack.c.b16 %v1190, %v1188
    %v1205 = vpack.c.b16 %v1193, %v1191
    %v1206 = vpack.c.b16 %v1194, %v1192
    %v1207 = vpack.c.b16 %v1197, %v1195
    %v1208 = vpack.c.b16 %v1198, %v1196
    %v1209 = vpack.c.b16 %v1201, %v1199
    %v1210 = vpack.c.b16 %v1202, %v1200
    %v1220 = vsel %vm161, %v1156, 0
    %1222 = vmatprep.subr.bf16.mxu0 %v1204
    %1223 = vmatpush1.bf16.msra.mxu0 %v1203
    %1224 = vmatprep.subr.bf16.mxu0 %v1206
    %1225 = vmatpush1.bf16.msra.mxu0 %v1205
    %1226 = vmatprep.subr.bf16.mxu0 %v1208
    %1227 = vmatpush1.bf16.msra.mxu0 %v1207
    %1228 = vmatprep.subr.bf16.mxu0 %v1210
    %1229 = vmatpush1.bf16.msra.mxu0 %v1209
    %1230 = vmatprep.subr.bf16.mxu0 0
    %1231 = vmatpush1.bf16.msra.mxu0 0
    %1232 = vmatprep.subr.bf16.mxu0 0
    %1233 = vmatpush1.bf16.msra.mxu0 0
    %1234 = vmatprep.subr.bf16.mxu0 0
    %1235 = vmatpush1.bf16.msra.mxu0 0
    %1236 = vmatprep.subr.bf16.mxu0 0
    %1237 = vmatpush1.bf16.msra.mxu0 0
    %1238 = vmatprep.subr.bf16.mxu0 0
    %1239 = vmatpush1.bf16.msra.mxu0 0
    %1240 = vmatprep.subr.bf16.mxu0 0
    %1241 = vmatpush1.bf16.msra.mxu0 0
    %1242 = vmatprep.subr.bf16.mxu0 0
    %1243 = vmatpush1.bf16.msra.mxu0 0
    %1244 = vmatprep.subr.bf16.mxu0 0
    %1245 = vmatpush1.bf16.msra.mxu0 0
    %1246 = vmatprep.subr.bf16.mxu0 0
    %1247 = vmatpush1.bf16.msra.mxu0 0
    %1248 = vmatprep.subr.bf16.mxu0 0
    %1249 = vmatpush1.bf16.msra.mxu0 0
    %1250 = vmatprep.subr.bf16.mxu0 0
    %1251 = vmatpush1.bf16.msra.mxu0 0
    %1252 = vmatprep.subr.bf16.mxu0 0
    %1253 = vmatpush1.bf16.msra.mxu0 0
    %1254 = vmatprep.mubr.bf16.mxu0 0
    %1255 = vmatmul.mubr.bf16.gmra.mrb[0].mxu0 %v1220
    %v1256 = vpop.f32.mrb[0].mxu0
    %v1257 = vadd.f32 %v1172, %v1256
    %v1258 = vpop.f32.mrb[0].mxu0
    %v1259 = vadd.f32 %v1176, %v1258
    %v1260 = vpop.f32.mrb[0].mxu0
    %v1261 = vadd.f32 %v1172, %v1260
    %v1262 = vpop.f32.mrb[0].mxu0
    %v1263 = vadd.f32 %v1176, %v1262
    %1264 = vdwg.mxu0
    %v1265 = vpack.c.bf16 %v1261, %v1257
    %v1266 = vpack.c.bf16 %v1263, %v1259
    %1268 = vrot.lane.b32.xlu0 %v1265, 64
    %v1269 = vpop.permute.xlu0 %1268
    %v1271 = vsel %vm461, %v1265, 0
    %v1274 = vsel %vm461, %v1269, 0
    %1276 = vmatprep.subr.bf16.mxu0 0
    %1277 = vmatpush1.bf16.xpose.msra.mxu0 %v1274
    %1278 = vmatprep.subr.bf16.mxu0 0
    %1279 = vmatpush1.bf16.xpose.msra.mxu0 0
    %1280 = vmatprep.subr.bf16.mxu0 0
    %1281 = vmatpush1.bf16.xpose.msra.mxu0 0
    %1282 = vmatprep.subr.bf16.mxu0 0
    %1283 = vmatpush1.bf16.xpose.msra.mxu0 0
    %1284 = vmatprep.subr.bf16.mxu0 0
    %1285 = vmatpush1.bf16.xpose.msra.mxu0 0
    %1286 = vmatprep.subr.bf16.mxu0 0
    %1287 = vmatpush1.bf16.xpose.msra.mxu0 0
    %1288 = vmatprep.subr.bf16.mxu0 0
    %1289 = vmatpush1.bf16.xpose.msra.mxu0 0
    %1290 = vmatprep.subr.bf16.mxu0 0
    %1291 = vmatpush1.bf16.xpose.msra.mxu0 0
    %1292 = vmatprep.subr.bf16.mxu0 0
    %1293 = vmatpush1.bf16.xpose.msra.mxu0 0
    %1294 = vmatprep.subr.bf16.mxu0 0
    %1295 = vmatpush1.bf16.xpose.msra.mxu0 0
    %1296 = vmatprep.subr.bf16.mxu0 0
    %1297 = vmatpush1.bf16.xpose.msra.mxu0 0
    %1298 = vmatprep.subr.bf16.mxu0 0
    %1299 = vmatpush1.bf16.xpose.msra.mxu0 0
    %1300 = vmatprep.subr.bf16.mxu0 0
    %1301 = vmatpush1.bf16.xpose.msra.mxu0 0
    %1302 = vmatprep.subr.bf16.mxu0 0
    %1303 = vmatpush1.bf16.xpose.msra.mxu0 0
    %1304 = vmatprep.subr.bf16.mxu0 0
    %1305 = vmatpush1.bf16.xpose.msra.mxu0 0
    %1306 = vmatprep.subr.bf16.mxu0 0
    %1307 = vmatpush1.bf16.xpose.msra.mxu0 0
    %1308 = vmatprep.mubr.bf16.mxu0 0
    %1309 = vmatmul.mubr.bf16.gmra.mrb[0].mxu0 %v1271
    %v1310 = vpop.f32.mrb[0].mxu0
    %v1311 = vadd.f32 %v347, %v1310
    %v1312 = vpop.f32.mrb[0].mxu0
    %v1313 = vpop.f32.mrb[0].mxu0
    %v1314 = vadd.f32 %v348, %v1313
    %v1315 = vpop.f32.mrb[0].mxu0
    %1316 = vdwg.mxu0
    %v1317 = vsel %vm116, %v1311, -inf
    %1318 = vmax.xlane.f32.xlu0 %v1317
    %v1319 = vpop.xlane.xlu0 %1318
    %v1320 = vsel %vm116, %v1314, -inf
    %1321 = vmax.xlane.f32.xlu0 %v1320
    %v1322 = vpop.xlane.xlu0 %1321
    %v1323 = vsub.f32 %v1311, %v1319
    %v1324 = vsub.f32 %v1314, %v1322
    %v1325 = vmul.f32 %v1323, 1.442695
    %v1326 = vpow.pop %v1325
    %v1327 = vmul.f32 %v1324, 1.442695
    %v1328 = vpow.pop %v1327
    %v1329 = vsel %vm116, %v1326, 0.0
    %1330 = vadd.xlane.f32.xlu0 %v1329
    %v1331 = vpop.xlane.xlu0 %1330
    %v1332 = vsel %vm116, %v1328, 0.0
    %1333 = vadd.xlane.f32.xlu0 %v1332
    %v1334 = vpop.xlane.xlu0 %1333
    %v1335 = vrcp.pop %v1331
    %v1336 = vrcp.pop %v1334
    %v1337 = vmul.f32 %v1326, %v1335
    %v1338 = vmul.f32 %v1328, %v1336
    %v1339 = vpack.c.bf16 %v1338, %v1337
    %v1341 = vsel %vm116, %v1339, 0
    %1343 = vmatprep.subr.bf16.mxu0 0
    %1344 = vmatpush1.bf16.msra.mxu0 %v1266
    %1345 = vmatprep.subr.bf16.mxu0 0
    %1346 = vmatpush1.bf16.msra.mxu0 0
    %1347 = vmatprep.subr.bf16.mxu0 0
    %1348 = vmatpush1.bf16.msra.mxu0 0
    %1349 = vmatprep.subr.bf16.mxu0 0
    %1350 = vmatpush1.bf16.msra.mxu0 0
    %1351 = vmatprep.subr.bf16.mxu0 0
    %1352 = vmatpush1.bf16.msra.mxu0 0
    %1353 = vmatprep.subr.bf16.mxu0 0
    %1354 = vmatpush1.bf16.msra.mxu0 0
    %1355 = vmatprep.subr.bf16.mxu0 0
    %1356 = vmatpush1.bf16.msra.mxu0 0
    %1357 = vmatprep.subr.bf16.mxu0 0
    %1358 = vmatpush1.bf16.msra.mxu0 0
    %1359 = vmatprep.subr.bf16.mxu0 0
    %1360 = vmatpush1.bf16.msra.mxu0 0
    %1361 = vmatprep.subr.bf16.mxu0 0
    %1362 = vmatpush1.bf16.msra.mxu0 0
    %1363 = vmatprep.subr.bf16.mxu0 0
    %1364 = vmatpush1.bf16.msra.mxu0 0
    %1365 = vmatprep.subr.bf16.mxu0 0
    %1366 = vmatpush1.bf16.msra.mxu0 0
    %1367 = vmatprep.subr.bf16.mxu0 0
    %1368 = vmatpush1.bf16.msra.mxu0 0
    %1369 = vmatprep.subr.bf16.mxu0 0
    %1370 = vmatpush1.bf16.msra.mxu0 0
    %1371 = vmatprep.subr.bf16.mxu0 0
    %1372 = vmatpush1.bf16.msra.mxu0 0
    %1373 = vmatprep.subr.bf16.mxu0 0
    %1374 = vmatpush1.bf16.msra.mxu0 0
    %1375 = vmatprep.mubr.bf16.mxu0 0
    %1376 = vmatmul.mubr.bf16.gmra.mrb[0].mxu0 %v1341
    %v1377 = vpop.f32.mrb[0].mxu0
    %v1378 = vadd.f32 0.0, %v1377
    %v1379 = vpop.f32.mrb[0].mxu0
    %v1380 = vpop.f32.mrb[0].mxu0
    %v1381 = vadd.f32 0.0, %v1380
    %v1382 = vpop.f32.mrb[0].mxu0
    %1383 = vdwg.mxu0
    %1384 = vrot.lane.b32.xlu0 %v1265, 96
    %v1385 = vpop.permute.xlu0 %1384
    %1386 = vrot.lane.b32.xlu0 %v1265, 32
    %v1387 = vpop.permute.xlu0 %1386
    %v1389 = vsel %vm461, %v1385, 0
    %v1392 = vsel %vm461, %v1387, 0
    %1394 = vmatprep.subr.bf16.mxu0 0
    %1395 = vmatpush1.bf16.xpose.msra.mxu0 %v1392
    %1396 = vmatprep.subr.bf16.mxu0 0
    %1397 = vmatpush1.bf16.xpose.msra.mxu0 0
    %1398 = vmatprep.subr.bf16.mxu0 0
    %1399 = vmatpush1.bf16.xpose.msra.mxu0 0
    %1400 = vmatprep.subr.bf16.mxu0 0
    %1401 = vmatpush1.bf16.xpose.msra.mxu0 0
    %1402 = vmatprep.subr.bf16.mxu0 0
    %1403 = vmatpush1.bf16.xpose.msra.mxu0 0
    %1404 = vmatprep.subr.bf16.mxu0 0
    %1405 = vmatpush1.bf16.xpose.msra.mxu0 0
    %1406 = vmatprep.subr.bf16.mxu0 0
    %1407 = vmatpush1.bf16.xpose.msra.mxu0 0
    %1408 = vmatprep.subr.bf16.mxu0 0
    %1409 = vmatpush1.bf16.xpose.msra.mxu0 0
    %1410 = vmatprep.subr.bf16.mxu0 0
    %1411 = vmatpush1.bf16.xpose.msra.mxu0 0
    %1412 = vmatprep.subr.bf16.mxu0 0
    %1413 = vmatpush1.bf16.xpose.msra.mxu0 0
    %1414 = vmatprep.subr.bf16.mxu0 0
    %1415 = vmatpush1.bf16.xpose.msra.mxu0 0
    %1416 = vmatprep.subr.bf16.mxu0 0
    %1417 = vmatpush1.bf16.xpose.msra.mxu0 0
    %1418 = vmatprep.subr.bf16.mxu0 0
    %1419 = vmatpush1.bf16.xpose.msra.mxu0 0
    %1420 = vmatprep.subr.bf16.mxu0 0
    %1421 = vmatpush1.bf16.xpose.msra.mxu0 0
    %1422 = vmatprep.subr.bf16.mxu0 0
    %1423 = vmatpush1.bf16.xpose.msra.mxu0 0
    %1424 = vmatprep.subr.bf16.mxu0 0
    %1425 = vmatpush1.bf16.xpose.msra.mxu0 0
    %1426 = vmatprep.mubr.bf16.mxu0 0
    %1427 = vmatmul.mubr.bf16.gmra.mrb[0].mxu0 %v1389
    %v1428 = vpop.f32.mrb[0].mxu0
    %v1429 = vadd.f32 %v347, %v1428
    %v1430 = vpop.f32.mrb[0].mxu0
    %v1431 = vpop.f32.mrb[0].mxu0
    %v1432 = vadd.f32 %v348, %v1431
    %v1433 = vpop.f32.mrb[0].mxu0
    %1434 = vdwg.mxu0
    %v1435 = vsel %vm116, %v1429, -inf
    %1436 = vmax.xlane.f32.xlu0 %v1435
    %v1437 = vpop.xlane.xlu0 %1436
    %v1438 = vsel %vm116, %v1432, -inf
    %1439 = vmax.xlane.f32.xlu0 %v1438
    %v1440 = vpop.xlane.xlu0 %1439
    %v1441 = vsub.f32 %v1429, %v1437
    %v1442 = vsub.f32 %v1432, %v1440
    %v1443 = vmul.f32 %v1441, 1.442695
    %v1444 = vpow.pop %v1443
    %v1445 = vmul.f32 %v1442, 1.442695
    %v1446 = vpow.pop %v1445
    %v1447 = vsel %vm116, %v1444, 0.0
    %1448 = vadd.xlane.f32.xlu0 %v1447
    %v1449 = vpop.xlane.xlu0 %1448
    %v1450 = vsel %vm116, %v1446, 0.0
    %1451 = vadd.xlane.f32.xlu0 %v1450
    %v1452 = vpop.xlane.xlu0 %1451
    %v1453 = vrcp.pop %v1449
    %v1454 = vrcp.pop %v1452
    %v1455 = vmul.f32 %v1444, %v1453
    %v1456 = vmul.f32 %v1446, %v1454
    %v1457 = vpack.c.bf16 %v1456, %v1455
    %1459 = vrot.lane.b32.xlu0 %v1266, 96
    %v1460 = vpop.permute.xlu0 %1459
    %v1463 = vsel %vm116, %v1457, 0
    %1465 = vmatprep.subr.bf16.mxu0 0
    %1466 = vmatpush1.bf16.msra.mxu0 %v1460
    %1467 = vmatprep.subr.bf16.mxu0 0
    %1468 = vmatpush1.bf16.msra.mxu0 0
    %1469 = vmatprep.subr.bf16.mxu0 0
    %1470 = vmatpush1.bf16.msra.mxu0 0
    %1471 = vmatprep.subr.bf16.mxu0 0
    %1472 = vmatpush1.bf16.msra.mxu0 0
    %1473 = vmatprep.subr.bf16.mxu0 0
    %1474 = vmatpush1.bf16.msra.mxu0 0
    %1475 = vmatprep.subr.bf16.mxu0 0
    %1476 = vmatpush1.bf16.msra.mxu0 0
    %1477 = vmatprep.subr.bf16.mxu0 0
    %1478 = vmatpush1.bf16.msra.mxu0 0
    %1479 = vmatprep.subr.bf16.mxu0 0
    %1480 = vmatpush1.bf16.msra.mxu0 0
    %1481 = vmatprep.subr.bf16.mxu0 0
    %1482 = vmatpush1.bf16.msra.mxu0 0
    %1483 = vmatprep.subr.bf16.mxu0 0
    %1484 = vmatpush1.bf16.msra.mxu0 0
    %1485 = vmatprep.subr.bf16.mxu0 0
    %1486 = vmatpush1.bf16.msra.mxu0 0
    %1487 = vmatprep.subr.bf16.mxu0 0
    %1488 = vmatpush1.bf16.msra.mxu0 0
    %1489 = vmatprep.subr.bf16.mxu0 0
    %1490 = vmatpush1.bf16.msra.mxu0 0
    %1491 = vmatprep.subr.bf16.mxu0 0
    %1492 = vmatpush1.bf16.msra.mxu0 0
    %1493 = vmatprep.subr.bf16.mxu0 0
    %1494 = vmatpush1.bf16.msra.mxu0 0
    %1495 = vmatprep.subr.bf16.mxu0 0
    %1496 = vmatpush1.bf16.msra.mxu0 0
    %1497 = vmatprep.mubr.bf16.mxu0 0
    %1498 = vmatmul.mubr.bf16.gmra.mrb[0].mxu0 %v1463
    %v1499 = vpop.f32.mrb[0].mxu0
    %v1500 = vadd.f32 0.0, %v1499
    %v1501 = vpop.f32.mrb[0].mxu0
    %v1502 = vpop.f32.mrb[0].mxu0
    %v1503 = vadd.f32 0.0, %v1502
    %v1504 = vpop.f32.mrb[0].mxu0
    %1505 = vdwg.mxu0
    %1508 = vrot.lane.b32.xlu0 %v1500, 32
    %v1509 = vpop.permute.xlu0 %1508
    %1510 = vrot.lane.b32.xlu0 %v1503, 32
    %v1511 = vpop.permute.xlu0 %1510
    %v1514 = vsel %vm461, %v1378, %v1509
    %v1515 = vsel %vm461, %v1381, %v1511
    %v1516 = vmax.f32 %v1514, 0.0
    %v1517 = vmax.f32 %v1515, 0.0
    %v1518 = vadd.f32 %v1516, %v1154
    %v1519 = vadd.f32 %v1517, %v1155
    %v1520 = vld [vmem:[%s6 + $0x8] sm:$0x1]
    %v1521 = vld [vmem:[%s6 + $0xb] sm:$0x1]
    %v1522 = vsel %vm161, %v1518, 0.0
    %1523 = vadd.xlane.f32.xlu0 %v1522
    %v1524 = vpop.xlane.xlu0 %1523
    %v1525 = vsel %vm161, %v1519, 0.0
    %1526 = vadd.xlane.f32.xlu0 %v1525
    %v1527 = vpop.xlane.xlu0 %1526
    %v1528 = vmul.f32 %v1524, %v168
    %v1529 = vmul.f32 %v1527, %v168
    %v1530 = vsub.f32 %v1518, %v1528
    %v1531 = vsub.f32 %v1519, %v1529
    %v1532 = vmul.f32 %v1530, %v1530
    %v1533 = vmul.f32 %v1531, %v1531
    %v1534 = vsel %vm161, %v1532, 0.0
    %1535 = vadd.xlane.f32.xlu0 %v1534
    %v1536 = vpop.xlane.xlu0 %1535
    %v1537 = vsel %vm161, %v1533, 0.0
    %1538 = vadd.xlane.f32.xlu0 %v1537
    %v1539 = vpop.xlane.xlu0 %1538
    %v1540 = vmul.f32 %v1536, %v168
    %v1541 = vmul.f32 %v1539, %v168
    %v1542 = vadd.f32 %v1540, 1e-05
    %v1543 = vadd.f32 %v1541, 1e-05
    %v1544 = vrsqrt.pop %v1542
    %v1545 = vrsqrt.pop %v1543
    %v1546 = vmul.f32 %v1530, %v1544
    %v1547 = vmul.f32 %v1531, %v1545
    %v1548 = vlaneseq
    %v1549 = vshrl.u32 %v1548, 7
    %v1550 = vsub.s32 0, %v1549
    %v1551 = vrot.slane %v1520, %v1550
    %v1552 = vmul.f32 %v1546, %v1551
    %v1553 = vmul.f32 %v1547, %v1551
    %v1554 = vlaneseq
    %v1555 = vshrl.u32 %v1554, 7
    %v1556 = vsub.s32 0, %v1555
    %v1557 = vrot.slane %v1521, %v1556
    %v1558 = vadd.f32 %v1552, %v1557
    %v1559 = vadd.f32 %v1553, %v1557
    %v1560 = vsel %vm161, %v1558, -inf
    %v1561 = vrot.slane %v1560, 4
    %v1562 = vmax.f32 %v1560, %v1561
    %v1563 = vrot.slane %v1562, 2
    %v1564 = vmax.f32 %v1562, %v1563
    %v1565 = vrot.slane %v1564, 1
    %v1566 = vmax.f32 %v1564, %v1565
    %v1567 = vsel %vm161, %v1559, -inf
    %v1568 = vrot.slane %v1567, 4
    %v1569 = vmax.f32 %v1567, %v1568
    %v1570 = vrot.slane %v1569, 2
    %v1571 = vmax.f32 %v1569, %v1570
    %v1572 = vrot.slane %v1571, 1
    %v1573 = vmax.f32 %v1571, %v1572
    %vm1576 = vcmask 1041409
    %v1577 = vsel %vm1576, %v1573, %v1566
    %v1579 = vsel %vm161, %v1577, 0.0
    %1580 = vst [vmem:[#allocation11] sm:$0x3] %v1579
    // Predicated region
    $region54: #{polygraph_forward.1} parent=1 // pred_check
      _
    $region55: #{polygraph_forward.1} parent=1 // pred_check_branch
      %1582 = sbr.rel (0) target = $region57
    $region56: #{polygraph_forward.1} parent=1 // pred_region
      %s1584 = ssub.s32 32, 32
      %1585 = vsyncadd [#allocation4], %s1584
      %s1587 = sshll.u32 [#allocation11], 4
      %s1588 = int_to_ptr.vmem [resolvable:$true] %s1587
      %1590 = dma.vmem_to_hbm [thread:$0]  %s1588, 32, %s8, [#allocation4]
    $region57: #{polygraph_forward.1} parent=1 // pred_fallthru
      _
    // Predicated region
    $region58: #{polygraph_forward.1} parent=1 // pred_check
      _
    $region59: #{polygraph_forward.1} parent=1 // pred_check_branch
      %1592 = sbr.rel (0) target = $region61
    $region60: #{polygraph_forward.1} parent=1 // pred_region
      %1593 = dma.done [#allocation4], 32
    $region61: #{polygraph_forward.1} parent=1 // pred_fallthru
      _
    %1594 = vsyncpa [#allocation3], 1
    %1595 = vsyncpa [#allocation6], 1
    %1596 = vsyncpa [#allocation9], 1
    %1597 = vsyncpa [#allocation4], 1

</llo_original>
